<compile_context>
chip_gen: v7x
topology: tpu7x:2x2x1
jax: 0.10.0
libtpu: 0.0.40
codegen_flags: <defaults>
</compile_context>

<pallas_src>
import functools
import math
import string

import numpy as np
import jax
import jax.numpy as jnp
from jax.experimental import pallas as pl
from jax.experimental.pallas import tpu as pltpu


def _round_up(x, m):
    return (x + m - 1) // m * m


def _pick_b_tile(batch, requested):
    """Multiple-of-8 batch tile; keep >= 2 grid steps when the batch allows it
    (the 1-D "parallel" grid axis is what feeds both v7x TensorCores)."""
    b8 = _round_up(batch, 8)
    bt = min(_round_up(max(int(requested), 8), 8), b8)
    if b8 >= 16:
        bt = min(bt, _round_up((batch + 1) // 2, 8))
    return max(bt, 8)


def _default_vmem_limit_bytes():
    """~3/4 of physical VMEM: ~96 MiB on v5e/v6e (128 MiB), ~48 MiB on v7x (64 MiB)."""
    try:
        cap = int(pltpu.get_tpu_info().vmem_capacity_bytes)
    except Exception:
        cap = 64 * 1024 * 1024          # conservative fallback, safe on all gens
    return int(max(32 * 1024 * 1024, min(cap * 3 // 4, 100 * 1024 * 1024)))


def _char_cnn_kernel(l_out, cids_ref, e_ref, convb_ref,
                     linw_ref, linb_ref, ln_g_ref, ln_b_ref, out_ref):
    """One batch tile.

    cids_ref : (Bt, Lp)            int32, -1 = padding (matches no vocab row)
    e_ref    : (fw_max, V_pad, D)  embedding table folded into each conv tap
                                   (D = nf*C), in the matmul compute dtype
    convb_ref: (1, D)  f32 fused conv bias
    linw_ref : (D, C)  compute dtype; linb/ln_g/ln_b: (1, C) f32
    out_ref  : (Bt, C) f32
    """
    ids = cids_ref[...]                                   # (Bt, Lp) int32
    bt, lp = ids.shape
    fw_max, v_pad, d_out = e_ref.shape
    rows = bt * lp

    # --- one-hot "gather" mask: compare/select in f32 (VPU-native everywhere),
    #     cast to the matmul dtype only at the dot boundary.  id = -1 and
    #     out-of-vocab ids match nothing -> zero embedding row (documented).
    iota_v = jax.lax.broadcasted_iota(jnp.int32, (1, 1, v_pad), 2)
    onehot = jnp.where(ids[:, :, None] == iota_v, 1.0, 0.0)    # (Bt, Lp, V_pad) f32
    onehot = onehot.reshape(rows, v_pad).astype(e_ref.dtype)   # tile-aligned collapse

    # --- conv: per-tap matmuls against the embedding-folded tables (K = 128),
    #     aligned with sublane rolls (XLU slot) and accumulated in f32. ---
    acc = jnp.dot(onehot, e_ref[0], preferred_element_type=jnp.float32)
    for k in range(1, fw_max):
        y_k = jnp.dot(onehot, e_ref[k], preferred_element_type=jnp.float32)
        acc = acc + pltpu.roll(y_k, shift=rows - k, axis=0)    # row r += y_k[r + k]
    conv = acc.reshape(bt, lp, d_out)                          # (Bt, Lp, D)

    # --- mask time positions >= l_out (all-padding windows and rolled-in rows)
    #     so they never enter the time-max. ---
    t_iota = jax.lax.broadcasted_iota(jnp.int32, (1, lp, d_out), 1)
    conv = jnp.where(t_iota < l_out, conv, -jnp.inf)
    feats = jnp.max(conv, axis=1)                              # (Bt, D)

    # --- bias + ReLU deferred past the time-max (exact: bias is time-constant,
    #     ReLU is monotone).  Dropout = identity in eval mode. ---
    h = jnp.maximum(feats + convb_ref[...], 0.0)

    # --- Linear(D -> C) ---
    y = jnp.dot(h.astype(linw_ref.dtype), linw_ref[...],
                preferred_element_type=jnp.float32)
    y = y + linb_ref[...]

    # --- LayerNorm over last dim (eps matches PyTorch default 1e-5) ---
    mean = jnp.mean(y, axis=-1, keepdims=True)
    var = jnp.mean((y - mean) ** 2, axis=-1, keepdims=True)
    y_norm = (y - mean) * jax.lax.rsqrt(var + 1e-5)
    out_ref[...] = y_norm * ln_g_ref[...] + ln_b_ref[...]


def char_cnn_forward(cids, params, filter_widths, *, b_tile=256,
                     compute_dtype=jnp.bfloat16):
    """cids: (B, L) int32, padded with -1 (-1 / out-of-vocab -> zero embedding)."""
    assert all(fw % 2 == 1 for fw in filter_widths), "odd filter widths only"

    table = params['emb'].astype(jnp.float32)        # (V+1, C), last row zeros
    V1, C = table.shape
    B, L = cids.shape
    nf = len(filter_widths)
    fw_max = max(filter_widths)
    P = (fw_max - 1) // 2
    l_out = L                                        # odd widths + same-padding
    Lp = _round_up(L + 2 * P, 8)                     # tile-aligned time axis

    # Vocab padded to a multiple of 128: one-hot last dim is lane-dense and the
    # conv contraction is exactly K = V_pad (padded rows are never selected).
    V_pad = _round_up(V1, 128)
    emb_pad = jnp.pad(table, ((0, V_pad - V1), (0, 0)))

    # Per-tap fused conv weights (zero taps pad narrow filters), then fold the
    # embedding table in offline:  E[k] = emb_pad @ w_tap_k -> (V_pad, nf*C).
    w_taps = jnp.zeros((fw_max, C, nf * C), jnp.float32)
    for i, fw in enumerate(filter_widths):
        off = P - (fw - 1) // 2
        w_taps = w_taps.at[off:off + fw, :, i * C:(i + 1) * C].set(
            params['conv_w'][i].astype(jnp.float32))
    E = jnp.einsum('vc,kcd->kvd', emb_pad, w_taps).astype(compute_dtype)
    b_fused = jnp.concatenate([b.astype(jnp.float32) for b in params['conv_b']],
                              axis=-1)                              # (1, nf*C)

    # Batch tiling: multiple of 8, >= 2 grid steps when possible (megacore/v7x).
    bt = _pick_b_tile(B, b_tile)
    B_pad = _round_up(B, bt)
    cids2 = jnp.pad(cids.astype(jnp.int32), ((0, B_pad - B), (P, Lp - L - P)),
                    constant_values=-1)                             # (B_pad, Lp)

    kernel = functools.partial(_char_cnn_kernel, l_out)
    out = pl.pallas_call(
        kernel,
        out_shape=jax.ShapeDtypeStruct((B_pad, C), jnp.float32),
        grid=(B_pad // bt,),
        in_specs=[
            pl.BlockSpec((bt, Lp), lambda i: (i, 0)),                  # char ids
            pl.BlockSpec((fw_max, V_pad, nf * C), lambda i: (0, 0, 0)),  # E tables
            pl.BlockSpec((1, nf * C), lambda i: (0, 0)),               # conv bias
            pl.BlockSpec((nf * C, C), lambda i: (0, 0)),               # linear W
            pl.BlockSpec((1, C), lambda i: (0, 0)),                    # linear b
            pl.BlockSpec((1, C), lambda i: (0, 0)),                    # LN gamma
            pl.BlockSpec((1, C), lambda i: (0, 0)),                    # LN beta
        ],
        out_specs=pl.BlockSpec((bt, C), lambda i: (i, 0)),
        compiler_params=pltpu.CompilerParams(
            dimension_semantics=("parallel",),
            vmem_limit_bytes=_default_vmem_limit_bytes()),
    )(cids2, E, b_fused,
      params['lin_w'].astype(compute_dtype),
      params['lin_b'].astype(jnp.float32),
      params['ln_g'].astype(jnp.float32),
      params['ln_b'].astype(jnp.float32))
    return out[:B]


def char_cnn_reference(cids, params, filter_widths):
    """Plain-JAX reference mirroring the PyTorch forward (eval mode)."""
    table = params['emb']
    cids = jnp.where(cids < 0, table.shape[0] - 1, cids)
    x = jnp.take(table, cids, axis=0)
    B, L, _ = x.shape
    feats = []
    for i, fw in enumerate(filter_widths):
        pad = (fw - 1) // 2
        xp = jnp.pad(x, ((0, 0), (pad, pad), (0, 0)))
        l_out = L + 2 * pad - fw + 1
        w, b = params['conv_w'][i], params['conv_b'][i]
        acc = sum(jnp.einsum('blc,cd->bld', xp[:, k:k + l_out, :], w[k])
                  for k in range(fw)) + b[None, :, :]
        feats.append(jnp.max(jax.nn.relu(acc), axis=1))
    h = jax.nn.relu(jnp.concatenate(feats, -1))
    y = h @ params['lin_w'] + params['lin_b']
    mean = y.mean(-1, keepdims=True)
    var = ((y - mean) ** 2).mean(-1, keepdims=True)
    return (y - mean) / jnp.sqrt(var + 1e-5) * params['ln_g'] + params['ln_b']


if __name__ == "__main__":
    # args.cnn_dim = 32, args.cnn_filter = [3, 5], args.cnn_dropout = 0.0
    hdim = 32
    filter_widths = (3, 5)

    ctoi = {c: i for i, c in enumerate(['<unk>'] + list(string.printable))}
    base_words = ["hello", "tpu", "pallas", "kernel", "mosaic", "vmem",
                  "char", "cnn"]
    words = (base_words * 2)[:11]            # B=11 -> exercises batch padding
    seqs = [[ctoi.get(c, ctoi['<unk>']) for c in '<' + w + '>'] for w in words]
    max_len = max(len(s) for s in seqs)
    cids = jnp.asarray(
        np.array([s + [-1] * (max_len - len(s)) for s in seqs], dtype=np.int32))

    # Deterministic parameter init (shapes match nn.Embedding/Conv1d/Linear/LN).
    key = jax.random.PRNGKey(0)
    ks = jax.random.split(key, 4 + 2 * len(filter_widths))
    V = len(ctoi)
    emb = 0.1 * jax.random.normal(ks[0], (V, hdim), jnp.float32)
    emb = jnp.concatenate([emb, jnp.zeros((1, hdim), jnp.float32)], axis=0)

    conv_w, conv_b = [], []
    for i, fw in enumerate(filter_widths):
        bound = 1.0 / math.sqrt(hdim * fw)
        conv_w.append(bound * jax.random.normal(ks[1 + 2 * i],
                                                (fw, hdim, hdim), jnp.float32))
        conv_b.append(bound * jax.random.normal(ks[2 + 2 * i],
                                                (1, hdim), jnp.float32))

    nf = len(filter_widths)
    lin_bound = 1.0 / math.sqrt(hdim * nf)
    params = dict(
        emb=emb,
        conv_w=conv_w,
        conv_b=conv_b,
        lin_w=lin_bound * jax.random.normal(ks[-3], (hdim * nf, hdim), jnp.float32),
        lin_b=lin_bound * jax.random.normal(ks[-2], (1, hdim), jnp.float32),
        ln_g=jnp.ones((1, hdim), jnp.float32),
        ln_b=jnp.zeros((1, hdim), jnp.float32),
    )

    ref = char_cnn_reference(cids, params, filter_widths)

    # Strict-numerics path (f32 matmul operands) — matches the PyTorch float32 module.
    out_f32 = char_cnn_forward(cids, params, filter_widths,
                               compute_dtype=jnp.float32)
    jax.block_until_ready(out_f32)
    assert out_f32.shape == (len(words), hdim)
    assert jnp.allclose(out_f32, ref, atol=2e-4, rtol=2e-4), "f32 mismatch vs reference"

    # Default fast path (bf16 matmul operands, f32 element-wise / f32 accumulate).
    out_bf16 = char_cnn_forward(cids, params, filter_widths)
    jax.block_until_ready(out_bf16)
    assert out_bf16.shape == (len(words), hdim)
    assert jnp.allclose(out_bf16, ref, atol=5e-2, rtol=5e-2), "bf16 mismatch vs reference"

    print("KERNEL_OK")
</pallas_src>

<mosaic_0001>
module attributes {stable_mosaic.version = 11 : i64} {
  func.func @_char_cnn_kernel(%arg0: i32, %arg1: memref<8x16xi32, #tpu.memory_space<vmem>>, %arg2: memref<5x128x64xf32, #tpu.memory_space<vmem>>, %arg3: memref<1x64xf32, #tpu.memory_space<vmem>>, %arg4: memref<64x32xf32, #tpu.memory_space<vmem>>, %arg5: memref<1x32xf32, #tpu.memory_space<vmem>>, %arg6: memref<1x32xf32, #tpu.memory_space<vmem>>, %arg7: memref<1x32xf32, #tpu.memory_space<vmem>>, %arg8: memref<8x32xf32, #tpu.memory_space<vmem>>) attributes {dimension_semantics = [#tpu.dimension_semantics<parallel>], iteration_bounds = array<i64: 2>, scalar_prefetch = 0 : i64, scratch_operands = 0 : i64, tpu.core_type = #tpu.core_type<tc>, window_params = [{transform_indices = @transform_0, window_bounds = array<i64: 8, 16>}, {pipeline_mode = #tpu.pipeline_mode<synchronous>, transform_indices = @transform_1, window_bounds = array<i64: 5, 128, 64>}, {pipeline_mode = #tpu.pipeline_mode<synchronous>, transform_indices = @transform_2, window_bounds = array<i64: 1, 64>}, {pipeline_mode = #tpu.pipeline_mode<synchronous>, transform_indices = @transform_3, window_bounds = array<i64: 64, 32>}, {pipeline_mode = #tpu.pipeline_mode<synchronous>, transform_indices = @transform_4, window_bounds = array<i64: 1, 32>}, {pipeline_mode = #tpu.pipeline_mode<synchronous>, transform_indices = @transform_5, window_bounds = array<i64: 1, 32>}, {pipeline_mode = #tpu.pipeline_mode<synchronous>, transform_indices = @transform_6, window_bounds = array<i64: 1, 32>}, {transform_indices = @transform_7, window_bounds = array<i64: 8, 32>}]} {
    %c0 = arith.constant 0 : index
    %c0_0 = arith.constant 0 : index
    %0 = vector.load %arg1[%c0, %c0_0] : memref<8x16xi32, #tpu.memory_space<vmem>>, vector<8x16xi32>
    %1 = tpu.iota {dimensions = array<i32: 2>} : vector<1x1x128xi32>
    %2 = vector.shape_cast %0 : vector<8x16xi32> to vector<8x16x1xi32>
    %3 = vector.broadcast %2 : vector<8x16x1xi32> to vector<8x16x128xi32>
    %4 = vector.broadcast %1 : vector<1x1x128xi32> to vector<8x16x128xi32>
    %5 = arith.cmpi eq, %3, %4 : vector<8x16x128xi32>
    %cst = arith.constant 1.000000e+00 : f32
    %cst_1 = arith.constant 0.000000e+00 : f32
    %6 = vector.broadcast %cst : f32 to vector<8x16x128xf32>
    %7 = vector.broadcast %cst_1 : f32 to vector<8x16x128xf32>
    %8 = arith.select %5, %6, %7 : vector<8x16x128xi1>, vector<8x16x128xf32>
    %9 = vector.shape_cast %8 : vector<8x16x128xf32> to vector<128x128xf32>
    %c0_2 = arith.constant 0 : index
    %c0_3 = arith.constant 0 : index
    %c0_4 = arith.constant 0 : index
    %10 = vector.load %arg2[%c0_2, %c0_3, %c0_4] : memref<5x128x64xf32, #tpu.memory_space<vmem>>, vector<1x128x64xf32>
    %11 = vector.shape_cast %10 : vector<1x128x64xf32> to vector<128x64xf32>
    %cst_5 = arith.constant dense<0.000000e+00> : vector<128x64xf32>
    %12 = tpu.matmul %9, %11, %cst_5 {dimension_numbers = #tpu.dot_dimension_numbers<[1], [0], [0], [1], [0, 0, 1, 1], [], []>} : vector<128x128xf32>, vector<128x64xf32>, vector<128x64xf32> -> vector<128x64xf32>
    %c1 = arith.constant 1 : index
    %c0_6 = arith.constant 0 : index
    %c0_7 = arith.constant 0 : index
    %13 = vector.load %arg2[%c1, %c0_6, %c0_7] : memref<5x128x64xf32, #tpu.memory_space<vmem>>, vector<1x128x64xf32>
    %14 = vector.shape_cast %13 : vector<1x128x64xf32> to vector<128x64xf32>
    %cst_8 = arith.constant dense<0.000000e+00> : vector<128x64xf32>
    %15 = tpu.matmul %9, %14, %cst_8 {dimension_numbers = #tpu.dot_dimension_numbers<[1], [0], [0], [1], [0, 0, 1, 1], [], []>} : vector<128x128xf32>, vector<128x64xf32>, vector<128x64xf32> -> vector<128x64xf32>
    %c127_i32 = arith.constant 127 : i32
    %16 = tpu.dynamic_rotate %15 by %c127_i32 dim 0 : vector<128x64xf32>, i32 -> vector<128x64xf32>
    %17 = arith.addf %12, %16 : vector<128x64xf32>
    %c2 = arith.constant 2 : index
    %c0_9 = arith.constant 0 : index
    %c0_10 = arith.constant 0 : index
    %18 = vector.load %arg2[%c2, %c0_9, %c0_10] : memref<5x128x64xf32, #tpu.memory_space<vmem>>, vector<1x128x64xf32>
    %19 = vector.shape_cast %18 : vector<1x128x64xf32> to vector<128x64xf32>
    %cst_11 = arith.constant dense<0.000000e+00> : vector<128x64xf32>
    %20 = tpu.matmul %9, %19, %cst_11 {dimension_numbers = #tpu.dot_dimension_numbers<[1], [0], [0], [1], [0, 0, 1, 1], [], []>} : vector<128x128xf32>, vector<128x64xf32>, vector<128x64xf32> -> vector<128x64xf32>
    %c126_i32 = arith.constant 126 : i32
    %21 = tpu.dynamic_rotate %20 by %c126_i32 dim 0 : vector<128x64xf32>, i32 -> vector<128x64xf32>
    %22 = arith.addf %17, %21 : vector<128x64xf32>
    %c3 = arith.constant 3 : index
    %c0_12 = arith.constant 0 : index
    %c0_13 = arith.constant 0 : index
    %23 = vector.load %arg2[%c3, %c0_12, %c0_13] : memref<5x128x64xf32, #tpu.memory_space<vmem>>, vector<1x128x64xf32>
    %24 = vector.shape_cast %23 : vector<1x128x64xf32> to vector<128x64xf32>
    %cst_14 = arith.constant dense<0.000000e+00> : vector<128x64xf32>
    %25 = tpu.matmul %9, %24, %cst_14 {dimension_numbers = #tpu.dot_dimension_numbers<[1], [0], [0], [1], [0, 0, 1, 1], [], []>} : vector<128x128xf32>, vector<128x64xf32>, vector<128x64xf32> -> vector<128x64xf32>
    %c125_i32 = arith.constant 125 : i32
    %26 = tpu.dynamic_rotate %25 by %c125_i32 dim 0 : vector<128x64xf32>, i32 -> vector<128x64xf32>
    %27 = arith.addf %22, %26 : vector<128x64xf32>
    %c4 = arith.constant 4 : index
    %c0_15 = arith.constant 0 : index
    %c0_16 = arith.constant 0 : index
    %28 = vector.load %arg2[%c4, %c0_15, %c0_16] : memref<5x128x64xf32, #tpu.memory_space<vmem>>, vector<1x128x64xf32>
    %29 = vector.shape_cast %28 : vector<1x128x64xf32> to vector<128x64xf32>
    %cst_17 = arith.constant dense<0.000000e+00> : vector<128x64xf32>
    %30 = tpu.matmul %9, %29, %cst_17 {dimension_numbers = #tpu.dot_dimension_numbers<[1], [0], [0], [1], [0, 0, 1, 1], [], []>} : vector<128x128xf32>, vector<128x64xf32>, vector<128x64xf32> -> vector<128x64xf32>
    %c124_i32 = arith.constant 124 : i32
    %31 = tpu.dynamic_rotate %30 by %c124_i32 dim 0 : vector<128x64xf32>, i32 -> vector<128x64xf32>
    %32 = arith.addf %27, %31 : vector<128x64xf32>
    %33 = vector.shape_cast %32 : vector<128x64xf32> to vector<8x16x64xf32>
    %34 = tpu.iota {dimensions = array<i32: 1>} : vector<1x16x64xi32>
    %c8_i32 = arith.constant 8 : i32
    %35 = vector.broadcast %c8_i32 : i32 to vector<1x16x64xi32>
    %36 = arith.cmpi slt, %34, %35 : vector<1x16x64xi32>
    %cst_18 = arith.constant 0xFF800000 : f32
    %37 = vector.shape_cast %36 : vector<1x16x64xi1> to vector<1x16x64xi1>
    %38 = vector.broadcast %37 : vector<1x16x64xi1> to vector<8x16x64xi1>
    %39 = vector.broadcast %cst_18 : f32 to vector<8x16x64xf32>
    %40 = arith.select %38, %33, %39 : vector<8x16x64xi1>, vector<8x16x64xf32>
    %cst_19 = arith.constant dense<0xFF800000> : vector<8x64xf32>
    %41 = vector.multi_reduction <maximumf>, %40, %cst_19 [1] : vector<8x16x64xf32> to vector<8x64xf32>
    %c0_20 = arith.constant 0 : index
    %c0_21 = arith.constant 0 : index
    %42 = vector.load %arg3[%c0_20, %c0_21] : memref<1x64xf32, #tpu.memory_space<vmem>>, vector<1x64xf32>
    %43 = vector.broadcast %42 : vector<1x64xf32> to vector<8x64xf32>
    %44 = arith.addf %41, %43 : vector<8x64xf32>
    %cst_22 = arith.constant 0.000000e+00 : f32
    %45 = vector.broadcast %cst_22 : f32 to vector<8x64xf32>
    %46 = arith.maximumf %44, %45 : vector<8x64xf32>
    %c0_23 = arith.constant 0 : index
    %c0_24 = arith.constant 0 : index
    %47 = vector.load %arg4[%c0_23, %c0_24] : memref<64x32xf32, #tpu.memory_space<vmem>>, vector<64x32xf32>
    %cst_25 = arith.constant dense<0.000000e+00> : vector<8x32xf32>
    %48 = tpu.matmul %46, %47, %cst_25 {dimension_numbers = #tpu.dot_dimension_numbers<[1], [0], [0], [1], [0, 0, 1, 1], [], []>} : vector<8x64xf32>, vector<64x32xf32>, vector<8x32xf32> -> vector<8x32xf32>
    %c0_26 = arith.constant 0 : index
    %c0_27 = arith.constant 0 : index
    %49 = vector.load %arg5[%c0_26, %c0_27] : memref<1x32xf32, #tpu.memory_space<vmem>>, vector<1x32xf32>
    %50 = vector.broadcast %49 : vector<1x32xf32> to vector<8x32xf32>
    %51 = arith.addf %48, %50 : vector<8x32xf32>
    %cst_28 = arith.constant dense<0.000000e+00> : vector<8xf32>
    %52 = vector.multi_reduction <add>, %51, %cst_28 [1] : vector<8x32xf32> to vector<8xf32>
    %53 = vector.shape_cast %52 : vector<8xf32> to vector<8x1xf32>
    %cst_29 = arith.constant 3.200000e+01 : f32
    %54 = vector.broadcast %cst_29 : f32 to vector<8x1xf32>
    %55 = arith.divf %53, %54 : vector<8x1xf32>
    %56 = vector.broadcast %55 : vector<8x1xf32> to vector<8x32xf32>
    %57 = arith.subf %51, %56 : vector<8x32xf32>
    %58 = arith.mulf %57, %57 : vector<8x32xf32>
    %cst_30 = arith.constant dense<0.000000e+00> : vector<8xf32>
    %59 = vector.multi_reduction <add>, %58, %cst_30 [1] : vector<8x32xf32> to vector<8xf32>
    %60 = vector.shape_cast %59 : vector<8xf32> to vector<8x1xf32>
    %cst_31 = arith.constant 3.200000e+01 : f32
    %61 = vector.broadcast %cst_31 : f32 to vector<8x1xf32>
    %62 = arith.divf %60, %61 : vector<8x1xf32>
    %63 = vector.broadcast %55 : vector<8x1xf32> to vector<8x32xf32>
    %64 = arith.subf %51, %63 : vector<8x32xf32>
    %cst_32 = arith.constant 9.99999974E-6 : f32
    %65 = vector.broadcast %cst_32 : f32 to vector<8x1xf32>
    %66 = arith.addf %62, %65 : vector<8x1xf32>
    %67 = math.rsqrt %66 : vector<8x1xf32>
    %68 = vector.broadcast %67 : vector<8x1xf32> to vector<8x32xf32>
    %69 = arith.mulf %64, %68 : vector<8x32xf32>
    %c0_33 = arith.constant 0 : index
    %c0_34 = arith.constant 0 : index
    %70 = vector.load %arg6[%c0_33, %c0_34] : memref<1x32xf32, #tpu.memory_space<vmem>>, vector<1x32xf32>
    %71 = vector.broadcast %70 : vector<1x32xf32> to vector<8x32xf32>
    %72 = arith.mulf %69, %71 : vector<8x32xf32>
    %c0_35 = arith.constant 0 : index
    %c0_36 = arith.constant 0 : index
    %73 = vector.load %arg7[%c0_35, %c0_36] : memref<1x32xf32, #tpu.memory_space<vmem>>, vector<1x32xf32>
    %74 = vector.broadcast %73 : vector<1x32xf32> to vector<8x32xf32>
    %75 = arith.addf %72, %74 : vector<8x32xf32>
    %c0_37 = arith.constant 0 : index
    %c0_38 = arith.constant 0 : index
    %76 = vector.load %arg8[%c0_37, %c0_38] : memref<8x32xf32, #tpu.memory_space<vmem>>, vector<8x32xf32>
    tpu.vector_store %arg8[%c0_37, %c0_38], %75 {strides = array<i32>} : memref<8x32xf32, #tpu.memory_space<vmem>>, vector<8x32xf32>,
    return
  }
  func.func @transform_0(%arg0: i32) -> (i32, i32) {
    %c0_i32 = arith.constant 0 : i32
    %c0_i32_0 = arith.constant 0 : i32
    return %arg0, %c0_i32 : i32, i32
  }
  func.func @transform_1(%arg0: i32) -> (i32, i32, i32) {
    %c0_i32 = arith.constant 0 : i32
    %c0_i32_0 = arith.constant 0 : i32
    %c0_i32_1 = arith.constant 0 : i32
    %c0_i32_2 = arith.constant 0 : i32
    return %c0_i32, %c0_i32_0, %c0_i32_1 : i32, i32, i32
  }
  func.func @transform_2(%arg0: i32) -> (i32, i32) {
    %c0_i32 = arith.constant 0 : i32
    %c0_i32_0 = arith.constant 0 : i32
    %c0_i32_1 = arith.constant 0 : i32
    return %c0_i32, %c0_i32_0 : i32, i32
  }
  func.func @transform_3(%arg0: i32) -> (i32, i32) {
    %c0_i32 = arith.constant 0 : i32
    %c0_i32_0 = arith.constant 0 : i32
    %c0_i32_1 = arith.constant 0 : i32
    return %c0_i32, %c0_i32_0 : i32, i32
  }
  func.func @transform_4(%arg0: i32) -> (i32, i32) {
    %c0_i32 = arith.constant 0 : i32
    %c0_i32_0 = arith.constant 0 : i32
    %c0_i32_1 = arith.constant 0 : i32
    return %c0_i32, %c0_i32_0 : i32, i32
  }
  func.func @transform_5(%arg0: i32) -> (i32, i32) {
    %c0_i32 = arith.constant 0 : i32
    %c0_i32_0 = arith.constant 0 : i32
    %c0_i32_1 = arith.constant 0 : i32
    return %c0_i32, %c0_i32_0 : i32, i32
  }
  func.func @transform_6(%arg0: i32) -> (i32, i32) {
    %c0_i32 = arith.constant 0 : i32
    %c0_i32_0 = arith.constant 0 : i32
    %c0_i32_1 = arith.constant 0 : i32
    return %c0_i32, %c0_i32_0 : i32, i32
  }
  func.func @transform_7(%arg0: i32) -> (i32, i32) {
    %c0_i32 = arith.constant 0 : i32
    %c0_i32_0 = arith.constant 0 : i32
    return %arg0, %c0_i32 : i32, i32
  }
}

</mosaic_0001>

<llo_original>
// kernel: tpu_custom_call.1
$region0: #{tpu_custom_call.1}
  #allocation0 [shape = 'u32[]', space=smem, size = 0x4, offset = 0x4, fixed_abs, tag = 'smem constant byte address 0x4 - core index']
  #allocation1 [shape = 'u32[144,128]{1,0:T(1,128)}', space=vmem, size = 0x12000, scoped, tag = 'internal scratch']
  %s0 = inlined_call_operand.vmem [shape: s32[16,16], index: 0, kind: input, shape index: {}]
  %s1 = inlined_call_operand.vmem [shape: f32[5,128,64], index: 1, kind: input, shape index: {}]
  %s2 = inlined_call_operand.vmem [shape: f32[1,64], index: 2, kind: input, shape index: {}]
  %s3 = inlined_call_operand.vmem [shape: f32[64,32], index: 3, kind: input, shape index: {}]
  %s4 = inlined_call_operand.vmem [shape: f32[1,32], index: 4, kind: input, shape index: {}]
  %s5 = inlined_call_operand.vmem [shape: f32[1,32], index: 5, kind: input, shape index: {}]
  %s6 = inlined_call_operand.vmem [shape: f32[1,32], index: 6, kind: input, shape index: {}]
  %s7 = inlined_call_operand.hbm [shape: f32[16,32], index: 7, kind: output, shape index: {}]
  %s8 = sld [smem:[#allocation0]]
  $region61: #{tpu_custom_call.1} parent=0
    _
  %s10 = ssub.s32 1, %s8
  %s11 = scalar_select 0, %s10, %s8
  $region1: #{tpu_custom_call.1} parent=0
    #allocation2 [shape = 'u8[8192]{0}', space=vmem, size = 0x2000, scoped, tag = 'output window, operand 0']
    #allocation3 [shape = 's32[2]{0}', space=sflag, size = 0x8, scoped, tag = 'scoped memory for tpu_custom_call.1']
    %12 = vsyncpa [#allocation3], 0
    %s13 = scalar_lea.sflag [#allocation3], 1
    %14 = vsyncpa %s13, 0
    loop: start=0, step=1, limit=4
    $region2: #{tpu_custom_call.1} parent=1 // loop_pre_header
      _
    $region3: #{tpu_custom_call.1} parent=1 // loop_header
      %s16 = sphi 0, %s20
      %p17 = scmp.ge.s32.totalorder %s16, 4
      %s26 = sphi 0, %s28
      %s29 = sphi 0, %s26
      %s30 = sphi 0, %s29
      %s46 = sphi 0, %s30
      %s50 = sphi 0, %s50
      %s52 = sphi 0, %s50
      %s53 = sphi 0, %s52
      %s67 = sphi 0, %s53
      %s71 = sphi 0, %s71
      %s73 = sphi 0, %s71
      %s74 = sphi 0, %s73
      %s88 = sphi 0, %s74
      %s92 = sphi 0, %s92
      %s94 = sphi 0, %s92
      %s95 = sphi 0, %s94
      %s109 = sphi 0, %s95
      %s113 = sphi 0, %s113
      %s115 = sphi 0, %s113
      %s116 = sphi 0, %s115
      %s130 = sphi 0, %s116
      %s134 = sphi 0, %s134
      %s136 = sphi 0, %s134
      %s137 = sphi 0, %s136
      %s151 = sphi 0, %s137
      %s155 = sphi 0, %s155
      %s157 = sphi 0, %s155
      %s158 = sphi 0, %s157
      %s172 = sphi 0, %s158
      %s178 = sphi 0, %s180
      %s181 = sphi 0, %s178
      %s182 = sphi 0, %s181
      %s198 = sphi 0, %s182
    $region4: #{tpu_custom_call.1} parent=1 // loop_header_branch
      %19 = sbr.rel (%p17) target = $region8
    $region5: #{tpu_custom_call.1} parent=1 // loop_body
      %s21 = ssub.s32 %s16, 1
      %s22 = ssub.s32 %s16, 2
      %s23 = sadd.s32 %s16, 1
      %s24 = ssub.s32 %s16, %s23
      %p25 = scmp.eq.s32.totalorder %s24, 0
      %s27 = sadd.s32 %s26, 1
      %s28 = scalar_select %p25, %s26, %s27
      %p31 = pneg %p25
      %p32 = scmp.eq.s32.totalorder %s16, 1
      %p33 = por %p31, %p32
      %p34 = scmp.ne.s32.totalorder %s26, %s29
      %p35 = scmp.eq.s32.totalorder %s16, 0
      %p36 = por %p34, %p35
      %p37 = scmp.ne.s32.totalorder %s26, %s29
      %p38 = scmp.eq.s32.totalorder %s21, 1
      %p39 = por %p37, %p38
      %p40 = scmp.ne.s32.totalorder %s29, %s30
      %p41 = scmp.eq.s32.totalorder %s21, 0
      %p42 = por %p40, %p41
      %p43 = scmp.ne.s32.totalorder %s29, %s30
      %p44 = scmp.eq.s32.totalorder %s22, 1
      %p45 = por %p43, %p44
      %p47 = scmp.ne.s32.totalorder %s30, %s46
      %p48 = scmp.eq.s32.totalorder %s22, 0
      %p49 = por %p47, %p48
      %s51 = sadd.s32 %s50, 1
      %p54 = scmp.eq.s32.totalorder %s16, 1
      %p55 = scmp.ne.s32.totalorder %s50, %s52
      %p56 = scmp.eq.s32.totalorder %s16, 0
      %p57 = por %p55, %p56
      %p58 = scmp.ne.s32.totalorder %s50, %s52
      %p59 = scmp.eq.s32.totalorder %s21, 1
      %p60 = por %p58, %p59
      %p61 = scmp.ne.s32.totalorder %s52, %s53
      %p62 = scmp.eq.s32.totalorder %s21, 0
      %p63 = por %p61, %p62
      %p64 = scmp.ne.s32.totalorder %s52, %s53
      %p65 = scmp.eq.s32.totalorder %s22, 1
      %p66 = por %p64, %p65
      %p68 = scmp.ne.s32.totalorder %s53, %s67
      %p69 = scmp.eq.s32.totalorder %s22, 0
      %p70 = por %p68, %p69
      %s72 = sadd.s32 %s71, 1
      %p75 = scmp.eq.s32.totalorder %s16, 1
      %p76 = scmp.ne.s32.totalorder %s71, %s73
      %p77 = scmp.eq.s32.totalorder %s16, 0
      %p78 = por %p76, %p77
      %p79 = scmp.ne.s32.totalorder %s71, %s73
      %p80 = scmp.eq.s32.totalorder %s21, 1
      %p81 = por %p79, %p80
      %p82 = scmp.ne.s32.totalorder %s73, %s74
      %p83 = scmp.eq.s32.totalorder %s21, 0
      %p84 = por %p82, %p83
      %p85 = scmp.ne.s32.totalorder %s73, %s74
      %p86 = scmp.eq.s32.totalorder %s22, 1
      %p87 = por %p85, %p86
      %p89 = scmp.ne.s32.totalorder %s74, %s88
      %p90 = scmp.eq.s32.totalorder %s22, 0
      %p91 = por %p89, %p90
      %s93 = sadd.s32 %s92, 1
      %p96 = scmp.eq.s32.totalorder %s16, 1
      %p97 = scmp.ne.s32.totalorder %s92, %s94
      %p98 = scmp.eq.s32.totalorder %s16, 0
      %p99 = por %p97, %p98
      %p100 = scmp.ne.s32.totalorder %s92, %s94
      %p101 = scmp.eq.s32.totalorder %s21, 1
      %p102 = por %p100, %p101
      %p103 = scmp.ne.s32.totalorder %s94, %s95
      %p104 = scmp.eq.s32.totalorder %s21, 0
      %p105 = por %p103, %p104
      %p106 = scmp.ne.s32.totalorder %s94, %s95
      %p107 = scmp.eq.s32.totalorder %s22, 1
      %p108 = por %p106, %p107
      %p110 = scmp.ne.s32.totalorder %s95, %s109
      %p111 = scmp.eq.s32.totalorder %s22, 0
      %p112 = por %p110, %p111
      %s114 = sadd.s32 %s113, 1
      %p117 = scmp.eq.s32.totalorder %s16, 1
      %p118 = scmp.ne.s32.totalorder %s113, %s115
      %p119 = scmp.eq.s32.totalorder %s16, 0
      %p120 = por %p118, %p119
      %p121 = scmp.ne.s32.totalorder %s113, %s115
      %p122 = scmp.eq.s32.totalorder %s21, 1
      %p123 = por %p121, %p122
      %p124 = scmp.ne.s32.totalorder %s115, %s116
      %p125 = scmp.eq.s32.totalorder %s21, 0
      %p126 = por %p124, %p125
      %p127 = scmp.ne.s32.totalorder %s115, %s116
      %p128 = scmp.eq.s32.totalorder %s22, 1
      %p129 = por %p127, %p128
      %p131 = scmp.ne.s32.totalorder %s116, %s130
      %p132 = scmp.eq.s32.totalorder %s22, 0
      %p133 = por %p131, %p132
      %s135 = sadd.s32 %s134, 1
      %p138 = scmp.eq.s32.totalorder %s16, 1
      %p139 = scmp.ne.s32.totalorder %s134, %s136
      %p140 = scmp.eq.s32.totalorder %s16, 0
      %p141 = por %p139, %p140
      %p142 = scmp.ne.s32.totalorder %s134, %s136
      %p143 = scmp.eq.s32.totalorder %s21, 1
      %p144 = por %p142, %p143
      %p145 = scmp.ne.s32.totalorder %s136, %s137
      %p146 = scmp.eq.s32.totalorder %s21, 0
      %p147 = por %p145, %p146
      %p148 = scmp.ne.s32.totalorder %s136, %s137
      %p149 = scmp.eq.s32.totalorder %s22, 1
      %p150 = por %p148, %p149
      %p152 = scmp.ne.s32.totalorder %s137, %s151
      %p153 = scmp.eq.s32.totalorder %s22, 0
      %p154 = por %p152, %p153
      %s156 = sadd.s32 %s155, 1
      %p159 = scmp.eq.s32.totalorder %s16, 1
      %p160 = scmp.ne.s32.totalorder %s155, %s157
      %p161 = scmp.eq.s32.totalorder %s16, 0
      %p162 = por %p160, %p161
      %p163 = scmp.ne.s32.totalorder %s155, %s157
      %p164 = scmp.eq.s32.totalorder %s21, 1
      %p165 = por %p163, %p164
      %p166 = scmp.ne.s32.totalorder %s157, %s158
      %p167 = scmp.eq.s32.totalorder %s21, 0
      %p168 = por %p166, %p167
      %p169 = scmp.ne.s32.totalorder %s157, %s158
      %p170 = scmp.eq.s32.totalorder %s22, 1
      %p171 = por %p169, %p170
      %p173 = scmp.ne.s32.totalorder %s158, %s172
      %p174 = scmp.eq.s32.totalorder %s22, 0
      %p175 = por %p173, %p174
      %s176 = ssub.s32 %s16, %s23
      %p177 = scmp.eq.s32.totalorder %s176, 0
      %s179 = sadd.s32 %s178, 1
      %s180 = scalar_select %p177, %s178, %s179
      %p183 = pneg %p177
      %p184 = scmp.eq.s32.totalorder %s16, 1
      %p185 = por %p183, %p184
      %p186 = scmp.ne.s32.totalorder %s178, %s181
      %p187 = scmp.eq.s32.totalorder %s16, 0
      %p188 = por %p186, %p187
      %p189 = scmp.ne.s32.totalorder %s178, %s181
      %p190 = scmp.eq.s32.totalorder %s21, 1
      %p191 = por %p189, %p190
      %p192 = scmp.ne.s32.totalorder %s181, %s182
      %p193 = scmp.eq.s32.totalorder %s21, 0
      %p194 = por %p192, %p193
      %p195 = scmp.ne.s32.totalorder %s181, %s182
      %p196 = scmp.eq.s32.totalorder %s22, 1
      %p197 = por %p195, %p196
      %p199 = scmp.ne.s32.totalorder %s182, %s198
      %p200 = scmp.eq.s32.totalorder %s22, 0
      %p201 = por %p199, %p200
      %p202 = scmp.le.s32.totalorder 1, %s16
      %p203 = scmp.lt.s32.totalorder %s16, 3
      %p204 = pnand %p202, %p203
      %p205 = pneg %p204
      // Predicated region
      $region9: #{tpu_custom_call.1} parent=5 // pred_check
        _
      $region10: #{tpu_custom_call.1} parent=5 // pred_check_branch
        %207 = sbr.rel (%p204) target = $region12
      $region11: #{tpu_custom_call.1} parent=5 // pred_region
        %s208 = ssub.s32 %s16, 1
        // Predicated region
        $region13: #{tpu_custom_call.1} parent=11 // pred_check
          %p209 = pneg %p63
        $region14: #{tpu_custom_call.1} parent=11 // pred_check_branch
          %211 = sbr.rel (%p209) target = $region16
        $region15: #{tpu_custom_call.1} parent=11 // pred_region
          _
        $region16: #{tpu_custom_call.1} parent=11 // pred_fallthru
          _
        // Predicated region
        $region17: #{tpu_custom_call.1} parent=11 // pred_check
          %p212 = pneg %p84
        $region18: #{tpu_custom_call.1} parent=11 // pred_check_branch
          %214 = sbr.rel (%p212) target = $region20
        $region19: #{tpu_custom_call.1} parent=11 // pred_region
          _
        $region20: #{tpu_custom_call.1} parent=11 // pred_fallthru
          _
        // Predicated region
        $region21: #{tpu_custom_call.1} parent=11 // pred_check
          %p215 = pneg %p105
        $region22: #{tpu_custom_call.1} parent=11 // pred_check_branch
          %217 = sbr.rel (%p215) target = $region24
        $region23: #{tpu_custom_call.1} parent=11 // pred_region
          _
        $region24: #{tpu_custom_call.1} parent=11 // pred_fallthru
          _
        // Predicated region
        $region25: #{tpu_custom_call.1} parent=11 // pred_check
          %p218 = pneg %p126
        $region26: #{tpu_custom_call.1} parent=11 // pred_check_branch
          %220 = sbr.rel (%p218) target = $region28
        $region27: #{tpu_custom_call.1} parent=11 // pred_region
          _
        $region28: #{tpu_custom_call.1} parent=11 // pred_fallthru
          _
        // Predicated region
        $region29: #{tpu_custom_call.1} parent=11 // pred_check
          %p221 = pneg %p147
        $region30: #{tpu_custom_call.1} parent=11 // pred_check_branch
          %223 = sbr.rel (%p221) target = $region32
        $region31: #{tpu_custom_call.1} parent=11 // pred_region
          _
        $region32: #{tpu_custom_call.1} parent=11 // pred_fallthru
          _
        // Predicated region
        $region33: #{tpu_custom_call.1} parent=11 // pred_check
          %p224 = pneg %p168
        $region34: #{tpu_custom_call.1} parent=11 // pred_check_branch
          %226 = sbr.rel (%p224) target = $region36
        $region35: #{tpu_custom_call.1} parent=11 // pred_region
          _
        $region36: #{tpu_custom_call.1} parent=11 // pred_fallthru
          _
      $region12: #{tpu_custom_call.1} parent=5 // pred_fallthru
        _
      %p227 = scmp.lt.s32.totalorder %s16, 2
      // Predicated region
      $region37: #{tpu_custom_call.1} parent=5 // pred_check
        %p228 = pneg %p227
      $region38: #{tpu_custom_call.1} parent=5 // pred_check_branch
        %230 = sbr.rel (%p228) target = $region40
      $region39: #{tpu_custom_call.1} parent=5 // pred_region
        // Predicated region
        $region41: #{tpu_custom_call.1} parent=39 // pred_check
          %p231 = pneg %p36
        $region42: #{tpu_custom_call.1} parent=39 // pred_check_branch
          %233 = sbr.rel (%p231) target = $region44
        $region43: #{tpu_custom_call.1} parent=39 // pred_region
          %p234 = scmp.lt.s32.totalorder %s16, 1
          %s235 = scalar_select %p234, %s16, 1
          %s236 = smul.addr %s235, 8
          %s237 = scalar_lea.vmem %s0, %s236
        $region44: #{tpu_custom_call.1} parent=39 // pred_fallthru
          _
      $region40: #{tpu_custom_call.1} parent=5 // pred_fallthru
        _
      %p238 = scmp.le.s32.totalorder 1, %s16
      %p239 = scmp.lt.s32.totalorder %s16, 3
      %p240 = pnand %p238, %p239
      %p241 = pneg %p240
      // Predicated region
      $region45: #{tpu_custom_call.1} parent=5 // pred_check
        _
      $region46: #{tpu_custom_call.1} parent=5 // pred_check_branch
        %243 = sbr.rel (%p240) target = $region48
      $region47: #{tpu_custom_call.1} parent=5 // pred_region
        %s244 = ssub.s32 %s16, 1
        %p245 = scmp.lt.s32.totalorder %s21, 1
        %s246 = scalar_select %p245, %s21, 1
        %s247 = smul.addr %s246, 8
        %s248 = scalar_lea.vmem %s0, %s247
        %p249 = pneg %p42
        %p250 = pneg %p39
        %p251 = pneg %p63
        %p252 = pneg %p60
        %p253 = pneg %p84
        %p254 = pneg %p81
        %p255 = pneg %p105
        %p256 = pneg %p102
        %p257 = pneg %p126
        %p258 = pneg %p123
        %p259 = pneg %p147
        %p260 = pneg %p144
        %p261 = pneg %p168
        %p262 = pneg %p165
        %p263 = pneg %p194
        %p264 = pneg %p191
        %s265 = sand.u32 %s181, 1
        %s266 = scalar_lea.sflag [#allocation3], %s265
        %s267 = sand.u32 %s181, 1
        %s268 = smul.addr %s267, 8
        %s269 = scalar_lea.vmem [#allocation2], %s268
        %p270 = scmp.lt.s32.totalorder %s21, 1
        %s271 = scalar_select %p270, %s21, 1
        %s272 = smul.addr %s271, 8
        %s273 = scalar_lea.vmem %s0, %s272
        %v274 = vld [vmem:[%s273] sm:$0xff]
        %v275 = vlaneseq
        %v276 = vand.u32 %v275, 127
        %v277 = vlaneseq
        %v278 = vshrl.u32 %v277, 7
        %v279 = vsub.s32 0, %v278
        %v280 = vrot.slane %v274, %v279
        %282 = vbcast.lane.b32.xlu0 %v280, 256
        %v283 = vpop.permute.xlu0 %282
        %s285 = sor.u32 256, 8
        %286 = vbcast.lane.b32.xlu0 %v280, %s285
        %v287 = vpop.permute.xlu0 %286
        %v288 = vlaneseq
        %v289 = vshrl.u32 %v288, 7
        %v290 = vsub.s32 1, %v289
        %v291 = vrot.slane %v274, %v290
        %293 = vbcast.lane.b32.xlu0 %v291, 256
        %v294 = vpop.permute.xlu0 %293
        %s296 = sor.u32 256, 8
        %297 = vbcast.lane.b32.xlu0 %v291, %s296
        %v298 = vpop.permute.xlu0 %297
        %v299 = vlaneseq
        %v300 = vshrl.u32 %v299, 7
        %v301 = vsub.s32 2, %v300
        %v302 = vrot.slane %v274, %v301
        %304 = vbcast.lane.b32.xlu0 %v302, 256
        %v305 = vpop.permute.xlu0 %304
        %s307 = sor.u32 256, 8
        %308 = vbcast.lane.b32.xlu0 %v302, %s307
        %v309 = vpop.permute.xlu0 %308
        %v310 = vlaneseq
        %v311 = vshrl.u32 %v310, 7
        %v312 = vsub.s32 3, %v311
        %v313 = vrot.slane %v274, %v312
        %315 = vbcast.lane.b32.xlu0 %v313, 256
        %v316 = vpop.permute.xlu0 %315
        %s318 = sor.u32 256, 8
        %319 = vbcast.lane.b32.xlu0 %v313, %s318
        %v320 = vpop.permute.xlu0 %319
        %v321 = vlaneseq
        %v322 = vshrl.u32 %v321, 7
        %v323 = vsub.s32 4, %v322
        %v324 = vrot.slane %v274, %v323
        %326 = vbcast.lane.b32.xlu0 %v324, 256
        %v327 = vpop.permute.xlu0 %326
        %s329 = sor.u32 256, 8
        %330 = vbcast.lane.b32.xlu0 %v324, %s329
        %v331 = vpop.permute.xlu0 %330
        %v332 = vlaneseq
        %v333 = vshrl.u32 %v332, 7
        %v334 = vsub.s32 5, %v333
        %v335 = vrot.slane %v274, %v334
        %337 = vbcast.lane.b32.xlu0 %v335, 256
        %v338 = vpop.permute.xlu0 %337
        %s340 = sor.u32 256, 8
        %341 = vbcast.lane.b32.xlu0 %v335, %s340
        %v342 = vpop.permute.xlu0 %341
        %v343 = vlaneseq
        %v344 = vshrl.u32 %v343, 7
        %v345 = vsub.s32 6, %v344
        %v346 = vrot.slane %v274, %v345
        %348 = vbcast.lane.b32.xlu0 %v346, 256
        %v349 = vpop.permute.xlu0 %348
        %s351 = sor.u32 256, 8
        %352 = vbcast.lane.b32.xlu0 %v346, %s351
        %v353 = vpop.permute.xlu0 %352
        %v354 = vlaneseq
        %v355 = vshrl.u32 %v354, 7
        %v356 = vsub.s32 7, %v355
        %v357 = vrot.slane %v274, %v356
        %359 = vbcast.lane.b32.xlu0 %v357, 256
        %v360 = vpop.permute.xlu0 %359
        %s362 = sor.u32 256, 8
        %363 = vbcast.lane.b32.xlu0 %v357, %s362
        %v364 = vpop.permute.xlu0 %363
        %vm365 = vcmp.eq.s32.totalorder %v283, %v276
        %vm366 = vcmp.eq.s32.totalorder %v287, %v276
        %vm367 = vcmp.eq.s32.totalorder %v294, %v276
        %vm368 = vcmp.eq.s32.totalorder %v298, %v276
        %vm369 = vcmp.eq.s32.totalorder %v305, %v276
        %vm370 = vcmp.eq.s32.totalorder %v309, %v276
        %vm371 = vcmp.eq.s32.totalorder %v316, %v276
        %vm372 = vcmp.eq.s32.totalorder %v320, %v276
        %vm373 = vcmp.eq.s32.totalorder %v327, %v276
        %vm374 = vcmp.eq.s32.totalorder %v331, %v276
        %vm375 = vcmp.eq.s32.totalorder %v338, %v276
        %vm376 = vcmp.eq.s32.totalorder %v342, %v276
        %vm377 = vcmp.eq.s32.totalorder %v349, %v276
        %vm378 = vcmp.eq.s32.totalorder %v353, %v276
        %vm379 = vcmp.eq.s32.totalorder %v360, %v276
        %vm380 = vcmp.eq.s32.totalorder %v364, %v276
        %v381 = vsel %vm365, 1.0, 0.0
        %v382 = vsel %vm366, 1.0, 0.0
        %v383 = vsel %vm367, 1.0, 0.0
        %v384 = vsel %vm368, 1.0, 0.0
        %v385 = vsel %vm369, 1.0, 0.0
        %v386 = vsel %vm370, 1.0, 0.0
        %v387 = vsel %vm371, 1.0, 0.0
        %v388 = vsel %vm372, 1.0, 0.0
        %v389 = vsel %vm373, 1.0, 0.0
        %v390 = vsel %vm374, 1.0, 0.0
        %v391 = vsel %vm375, 1.0, 0.0
        %v392 = vsel %vm376, 1.0, 0.0
        %v393 = vsel %vm377, 1.0, 0.0
        %v394 = vsel %vm378, 1.0, 0.0
        %v395 = vsel %vm379, 1.0, 0.0
        %v396 = vsel %vm380, 1.0, 0.0
        %v397 = vld [vmem:[%s1] sm:$0xff]
        %v398 = vld [vmem:[%s1 + $0x8] sm:$0xff]
        %v399 = vld [vmem:[%s1 + $0x10] sm:$0xff]
        %v400 = vld [vmem:[%s1 + $0x18] sm:$0xff]
        %v401 = vld [vmem:[%s1 + $0x20] sm:$0xff]
        %v402 = vld [vmem:[%s1 + $0x28] sm:$0xff]
        %v403 = vld [vmem:[%s1 + $0x30] sm:$0xff]
        %v404 = vld [vmem:[%s1 + $0x38] sm:$0xff]
        %v405 = vld [vmem:[%s1 + $0x40] sm:$0xff]
        %v406 = vld [vmem:[%s1 + $0x48] sm:$0xff]
        %v407 = vld [vmem:[%s1 + $0x50] sm:$0xff]
        %v408 = vld [vmem:[%s1 + $0x58] sm:$0xff]
        %v409 = vld [vmem:[%s1 + $0x60] sm:$0xff]
        %v410 = vld [vmem:[%s1 + $0x68] sm:$0xff]
        %v411 = vld [vmem:[%s1 + $0x70] sm:$0xff]
        %v412 = vld [vmem:[%s1 + $0x78] sm:$0xff]
        %s413 = scalar_lea.vmem %s1, 128
        %v414 = vld [vmem:[%s413] sm:$0xff]
        %v415 = vld [vmem:[%s413 + $0x8] sm:$0xff]
        %v416 = vld [vmem:[%s413 + $0x10] sm:$0xff]
        %v417 = vld [vmem:[%s413 + $0x18] sm:$0xff]
        %v418 = vld [vmem:[%s413 + $0x20] sm:$0xff]
        %v419 = vld [vmem:[%s413 + $0x28] sm:$0xff]
        %v420 = vld [vmem:[%s413 + $0x30] sm:$0xff]
        %v421 = vld [vmem:[%s413 + $0x38] sm:$0xff]
        %v422 = vld [vmem:[%s413 + $0x40] sm:$0xff]
        %v423 = vld [vmem:[%s413 + $0x48] sm:$0xff]
        %v424 = vld [vmem:[%s413 + $0x50] sm:$0xff]
        %v425 = vld [vmem:[%s413 + $0x58] sm:$0xff]
        %v426 = vld [vmem:[%s413 + $0x60] sm:$0xff]
        %v427 = vld [vmem:[%s413 + $0x68] sm:$0xff]
        %v428 = vld [vmem:[%s413 + $0x70] sm:$0xff]
        %v429 = vld [vmem:[%s413 + $0x78] sm:$0xff]
        %430 = vmatprep.subr.mxu0 0.0
        %431 = vmatpush1.msra.mxu0 %v414
        %432 = vmatprep.subr.mxu0 0.0
        %433 = vmatpush1.msra.mxu0 %v415
        %434 = vmatprep.subr.mxu0 0.0
        %435 = vmatpush1.msra.mxu0 %v416
        %436 = vmatprep.subr.mxu0 0.0
        %437 = vmatpush1.msra.mxu0 %v417
        %438 = vmatprep.subr.mxu0 0.0
        %439 = vmatpush1.msra.mxu0 %v418
        %440 = vmatprep.subr.mxu0 0.0
        %441 = vmatpush1.msra.mxu0 %v419
        %442 = vmatprep.subr.mxu0 0.0
        %443 = vmatpush1.msra.mxu0 %v420
        %444 = vmatprep.subr.mxu0 0.0
        %445 = vmatpush1.msra.mxu0 %v421
        %446 = vmatprep.subr.mxu0 0.0
        %447 = vmatpush1.msra.mxu0 %v422
        %448 = vmatprep.subr.mxu0 0.0
        %449 = vmatpush1.msra.mxu0 %v423
        %450 = vmatprep.subr.mxu0 0.0
        %451 = vmatpush1.msra.mxu0 %v424
        %452 = vmatprep.subr.mxu0 0.0
        %453 = vmatpush1.msra.mxu0 %v425
        %454 = vmatprep.subr.mxu0 0.0
        %455 = vmatpush1.msra.mxu0 %v426
        %456 = vmatprep.subr.mxu0 0.0
        %457 = vmatpush1.msra.mxu0 %v427
        %458 = vmatprep.subr.mxu0 0.0
        %459 = vmatpush1.msra.mxu0 %v428
        %460 = vmatprep.subr.mxu0 0.0
        %461 = vmatpush1.msra.mxu0 %v429
        %462 = vmatprep.subr.mxu0 0.0
        %463 = vmatpush1.msra.mxu0 0.0
        %464 = vmatprep.subr.mxu0 0.0
        %465 = vmatpush1.msra.mxu0 0.0
        %466 = vmatprep.subr.mxu0 0.0
        %467 = vmatpush1.msra.mxu0 0.0
        %468 = vmatprep.subr.mxu0 0.0
        %469 = vmatpush1.msra.mxu0 0.0
        %470 = vmatprep.subr.mxu0 0.0
        %471 = vmatpush1.msra.mxu0 0.0
        %472 = vmatprep.subr.mxu0 0.0
        %473 = vmatpush1.msra.mxu0 0.0
        %474 = vmatprep.subr.mxu0 0.0
        %475 = vmatpush1.msra.mxu0 0.0
        %476 = vmatprep.subr.mxu0 0.0
        %477 = vmatpush1.msra.mxu0 0.0
        %478 = vmatprep.subr.mxu0 0.0
        %479 = vmatpush1.msra.mxu0 0.0
        %480 = vmatprep.subr.mxu0 0.0
        %481 = vmatpush1.msra.mxu0 0.0
        %482 = vmatprep.subr.mxu0 0.0
        %483 = vmatpush1.msra.mxu0 0.0
        %484 = vmatprep.subr.mxu0 0.0
        %485 = vmatpush1.msra.mxu0 0.0
        %486 = vmatprep.subr.mxu0 0.0
        %487 = vmatpush1.msra.mxu0 0.0
        %488 = vmatprep.subr.mxu0 0.0
        %489 = vmatpush1.msra.mxu0 0.0
        %490 = vmatprep.subr.mxu0 0.0
        %491 = vmatpush1.msra.mxu0 0.0
        %492 = vmatprep.subr.mxu0 0.0
        %493 = vmatpush1.msra.mxu0 0.0
        %494 = vmatprep.mubr.f32.mxu0 0.0
        %495 = vmatmul.mubr.f32.gmra.mrb[0].mxu0 %v381
        %v496 = vpop.f32.mrb[0].mxu0
        %v497 = vadd.f32 0.0, %v496
        %v498 = vpop.f32.mrb[0].mxu0
        %499 = vmatprep.mubr.f32.mxu0 0.0
        %500 = vmatmul.mubr.f32.gmra.mrb[0].mxu0 %v382
        %v501 = vpop.f32.mrb[0].mxu0
        %v502 = vadd.f32 0.0, %v501
        %v503 = vpop.f32.mrb[0].mxu0
        %504 = vmatprep.mubr.f32.mxu0 0.0
        %505 = vmatmul.mubr.f32.gmra.mrb[0].mxu0 %v383
        %v506 = vpop.f32.mrb[0].mxu0
        %v507 = vadd.f32 0.0, %v506
        %v508 = vpop.f32.mrb[0].mxu0
        %509 = vmatprep.mubr.f32.mxu0 0.0
        %510 = vmatmul.mubr.f32.gmra.mrb[0].mxu0 %v384
        %v511 = vpop.f32.mrb[0].mxu0
        %v512 = vadd.f32 0.0, %v511
        %v513 = vpop.f32.mrb[0].mxu0
        %514 = vmatprep.mubr.f32.mxu0 0.0
        %515 = vmatmul.mubr.f32.gmra.mrb[0].mxu0 %v385
        %v516 = vpop.f32.mrb[0].mxu0
        %v517 = vadd.f32 0.0, %v516
        %v518 = vpop.f32.mrb[0].mxu0
        %519 = vmatprep.mubr.f32.mxu0 0.0
        %520 = vmatmul.mubr.f32.gmra.mrb[0].mxu0 %v386
        %v521 = vpop.f32.mrb[0].mxu0
        %v522 = vadd.f32 0.0, %v521
        %v523 = vpop.f32.mrb[0].mxu0
        %524 = vmatprep.mubr.f32.mxu0 0.0
        %525 = vmatmul.mubr.f32.gmra.mrb[0].mxu0 %v387
        %v526 = vpop.f32.mrb[0].mxu0
        %v527 = vadd.f32 0.0, %v526
        %v528 = vpop.f32.mrb[0].mxu0
        %529 = vmatprep.mubr.f32.mxu0 0.0
        %530 = vmatmul.mubr.f32.gmra.mrb[0].mxu0 %v388
        %v531 = vpop.f32.mrb[0].mxu0
        %v532 = vadd.f32 0.0, %v531
        %v533 = vpop.f32.mrb[0].mxu0
        %534 = vmatprep.mubr.f32.mxu0 0.0
        %535 = vmatmul.mubr.f32.gmra.mrb[0].mxu0 %v389
        %v536 = vpop.f32.mrb[0].mxu0
        %v537 = vadd.f32 0.0, %v536
        %v538 = vpop.f32.mrb[0].mxu0
        %539 = vmatprep.mubr.f32.mxu0 0.0
        %540 = vmatmul.mubr.f32.gmra.mrb[0].mxu0 %v390
        %v541 = vpop.f32.mrb[0].mxu0
        %v542 = vadd.f32 0.0, %v541
        %v543 = vpop.f32.mrb[0].mxu0
        %544 = vmatprep.mubr.f32.mxu0 0.0
        %545 = vmatmul.mubr.f32.gmra.mrb[0].mxu0 %v391
        %v546 = vpop.f32.mrb[0].mxu0
        %v547 = vadd.f32 0.0, %v546
        %v548 = vpop.f32.mrb[0].mxu0
        %549 = vmatprep.mubr.f32.mxu0 0.0
        %550 = vmatmul.mubr.f32.gmra.mrb[0].mxu0 %v392
        %v551 = vpop.f32.mrb[0].mxu0
        %v552 = vadd.f32 0.0, %v551
        %v553 = vpop.f32.mrb[0].mxu0
        %554 = vmatprep.mubr.f32.mxu0 0.0
        %555 = vmatmul.mubr.f32.gmra.mrb[0].mxu0 %v393
        %v556 = vpop.f32.mrb[0].mxu0
        %v557 = vadd.f32 0.0, %v556
        %v558 = vpop.f32.mrb[0].mxu0
        %559 = vmatprep.mubr.f32.mxu0 0.0
        %560 = vmatmul.mubr.f32.gmra.mrb[0].mxu0 %v394
        %v561 = vpop.f32.mrb[0].mxu0
        %v562 = vadd.f32 0.0, %v561
        %v563 = vpop.f32.mrb[0].mxu0
        %564 = vmatprep.mubr.f32.mxu0 0.0
        %565 = vmatmul.mubr.f32.gmra.mrb[0].mxu0 %v395
        %v566 = vpop.f32.mrb[0].mxu0
        %v567 = vadd.f32 0.0, %v566
        %v568 = vpop.f32.mrb[0].mxu0
        %569 = vmatprep.mubr.f32.mxu0 0.0
        %570 = vmatmul.mubr.f32.gmra.mrb[0].mxu0 %v396
        %v571 = vpop.f32.mrb[0].mxu0
        %v572 = vadd.f32 0.0, %v571
        %v573 = vpop.f32.mrb[0].mxu0
        %574 = vdwg.mxu0
        %v575 = vrot.slane %v497, 1
        %v576 = vrot.slane %v502, 1
        %v577 = vrot.slane %v507, 1
        %v578 = vrot.slane %v512, 1
        %v579 = vrot.slane %v517, 1
        %v580 = vrot.slane %v522, 1
        %v581 = vrot.slane %v527, 1
        %v582 = vrot.slane %v532, 1
        %v583 = vrot.slane %v537, 1
        %v584 = vrot.slane %v542, 1
        %v585 = vrot.slane %v547, 1
        %v586 = vrot.slane %v552, 1
        %v587 = vrot.slane %v557, 1
        %v588 = vrot.slane %v562, 1
        %v589 = vrot.slane %v567, 1
        %v590 = vrot.slane %v572, 1
        %v591 = vlaneseq
        %v592 = vshrl.u32 %v591, 7
        %vm593 = vcmp.lt.s32.totalorder %v592, 7
        %v594 = vsel %vm593, %v589, %v590
        %v595 = vsel %vm593, %v588, %v589
        %v596 = vsel %vm593, %v587, %v588
        %v597 = vsel %vm593, %v586, %v587
        %v598 = vsel %vm593, %v585, %v586
        %v599 = vsel %vm593, %v584, %v585
        %v600 = vsel %vm593, %v583, %v584
        %v601 = vsel %vm593, %v582, %v583
        %v602 = vsel %vm593, %v581, %v582
        %v603 = vsel %vm593, %v580, %v581
        %v604 = vsel %vm593, %v579, %v580
        %v605 = vsel %vm593, %v578, %v579
        %v606 = vsel %vm593, %v577, %v578
        %v607 = vsel %vm593, %v576, %v577
        %v608 = vsel %vm593, %v575, %v576
        %v609 = vsel %vm593, %v590, %v575
        %610 = vmatprep.subr.mxu0 0.0
        %611 = vmatpush1.msra.mxu0 %v397
        %612 = vmatprep.subr.mxu0 0.0
        %613 = vmatpush1.msra.mxu0 %v398
        %614 = vmatprep.subr.mxu0 0.0
        %615 = vmatpush1.msra.mxu0 %v399
        %616 = vmatprep.subr.mxu0 0.0
        %617 = vmatpush1.msra.mxu0 %v400
        %618 = vmatprep.subr.mxu0 0.0
        %619 = vmatpush1.msra.mxu0 %v401
        %620 = vmatprep.subr.mxu0 0.0
        %621 = vmatpush1.msra.mxu0 %v402
        %622 = vmatprep.subr.mxu0 0.0
        %623 = vmatpush1.msra.mxu0 %v403
        %624 = vmatprep.subr.mxu0 0.0
        %625 = vmatpush1.msra.mxu0 %v404
        %626 = vmatprep.subr.mxu0 0.0
        %627 = vmatpush1.msra.mxu0 %v405
        %628 = vmatprep.subr.mxu0 0.0
        %629 = vmatpush1.msra.mxu0 %v406
        %630 = vmatprep.subr.mxu0 0.0
        %631 = vmatpush1.msra.mxu0 %v407
        %632 = vmatprep.subr.mxu0 0.0
        %633 = vmatpush1.msra.mxu0 %v408
        %634 = vmatprep.subr.mxu0 0.0
        %635 = vmatpush1.msra.mxu0 %v409
        %636 = vmatprep.subr.mxu0 0.0
        %637 = vmatpush1.msra.mxu0 %v410
        %638 = vmatprep.subr.mxu0 0.0
        %639 = vmatpush1.msra.mxu0 %v411
        %640 = vmatprep.subr.mxu0 0.0
        %641 = vmatpush1.msra.mxu0 %v412
        %642 = vmatprep.subr.mxu0 0.0
        %643 = vmatpush1.msra.mxu0 0.0
        %644 = vmatprep.subr.mxu0 0.0
        %645 = vmatpush1.msra.mxu0 0.0
        %646 = vmatprep.subr.mxu0 0.0
        %647 = vmatpush1.msra.mxu0 0.0
        %648 = vmatprep.subr.mxu0 0.0
        %649 = vmatpush1.msra.mxu0 0.0
        %650 = vmatprep.subr.mxu0 0.0
        %651 = vmatpush1.msra.mxu0 0.0
        %652 = vmatprep.subr.mxu0 0.0
        %653 = vmatpush1.msra.mxu0 0.0
        %654 = vmatprep.subr.mxu0 0.0
        %655 = vmatpush1.msra.mxu0 0.0
        %656 = vmatprep.subr.mxu0 0.0
        %657 = vmatpush1.msra.mxu0 0.0
        %658 = vmatprep.subr.mxu0 0.0
        %659 = vmatpush1.msra.mxu0 0.0
        %660 = vmatprep.subr.mxu0 0.0
        %661 = vmatpush1.msra.mxu0 0.0
        %662 = vmatprep.subr.mxu0 0.0
        %663 = vmatpush1.msra.mxu0 0.0
        %664 = vmatprep.subr.mxu0 0.0
        %665 = vmatpush1.msra.mxu0 0.0
        %666 = vmatprep.subr.mxu0 0.0
        %667 = vmatpush1.msra.mxu0 0.0
        %668 = vmatprep.subr.mxu0 0.0
        %669 = vmatpush1.msra.mxu0 0.0
        %670 = vmatprep.subr.mxu0 0.0
        %671 = vmatpush1.msra.mxu0 0.0
        %672 = vmatprep.subr.mxu0 0.0
        %673 = vmatpush1.msra.mxu0 0.0
        %674 = vmatprep.mubr.f32.mxu0 0.0
        %675 = vmatmul.mubr.f32.gmra.mrb[0].mxu0 %v381
        %v676 = vpop.f32.mrb[0].mxu0
        %v677 = vadd.f32 %v608, %v676
        %v678 = vpop.f32.mrb[0].mxu0
        %679 = vmatprep.mubr.f32.mxu0 0.0
        %680 = vmatmul.mubr.f32.gmra.mrb[0].mxu0 %v382
        %v681 = vpop.f32.mrb[0].mxu0
        %v682 = vadd.f32 %v607, %v681
        %v683 = vpop.f32.mrb[0].mxu0
        %684 = vmatprep.mubr.f32.mxu0 0.0
        %685 = vmatmul.mubr.f32.gmra.mrb[0].mxu0 %v383
        %v686 = vpop.f32.mrb[0].mxu0
        %v687 = vadd.f32 %v606, %v686
        %v688 = vpop.f32.mrb[0].mxu0
        %689 = vmatprep.mubr.f32.mxu0 0.0
        %690 = vmatmul.mubr.f32.gmra.mrb[0].mxu0 %v384
        %v691 = vpop.f32.mrb[0].mxu0
        %v692 = vadd.f32 %v605, %v691
        %v693 = vpop.f32.mrb[0].mxu0
        %694 = vmatprep.mubr.f32.mxu0 0.0
        %695 = vmatmul.mubr.f32.gmra.mrb[0].mxu0 %v385
        %v696 = vpop.f32.mrb[0].mxu0
        %v697 = vadd.f32 %v604, %v696
        %v698 = vpop.f32.mrb[0].mxu0
        %699 = vmatprep.mubr.f32.mxu0 0.0
        %700 = vmatmul.mubr.f32.gmra.mrb[0].mxu0 %v386
        %v701 = vpop.f32.mrb[0].mxu0
        %v702 = vadd.f32 %v603, %v701
        %v703 = vpop.f32.mrb[0].mxu0
        %704 = vmatprep.mubr.f32.mxu0 0.0
        %705 = vmatmul.mubr.f32.gmra.mrb[0].mxu0 %v387
        %v706 = vpop.f32.mrb[0].mxu0
        %v707 = vadd.f32 %v602, %v706
        %v708 = vpop.f32.mrb[0].mxu0
        %709 = vmatprep.mubr.f32.mxu0 0.0
        %710 = vmatmul.mubr.f32.gmra.mrb[0].mxu0 %v388
        %v711 = vpop.f32.mrb[0].mxu0
        %v712 = vadd.f32 %v601, %v711
        %v713 = vpop.f32.mrb[0].mxu0
        %714 = vmatprep.mubr.f32.mxu0 0.0
        %715 = vmatmul.mubr.f32.gmra.mrb[0].mxu0 %v389
        %v716 = vpop.f32.mrb[0].mxu0
        %v717 = vadd.f32 %v600, %v716
        %v718 = vpop.f32.mrb[0].mxu0
        %719 = vmatprep.mubr.f32.mxu0 0.0
        %720 = vmatmul.mubr.f32.gmra.mrb[0].mxu0 %v390
        %v721 = vpop.f32.mrb[0].mxu0
        %v722 = vadd.f32 %v599, %v721
        %v723 = vpop.f32.mrb[0].mxu0
        %724 = vmatprep.mubr.f32.mxu0 0.0
        %725 = vmatmul.mubr.f32.gmra.mrb[0].mxu0 %v391
        %v726 = vpop.f32.mrb[0].mxu0
        %v727 = vadd.f32 %v598, %v726
        %v728 = vpop.f32.mrb[0].mxu0
        %729 = vmatprep.mubr.f32.mxu0 0.0
        %730 = vmatmul.mubr.f32.gmra.mrb[0].mxu0 %v392
        %v731 = vpop.f32.mrb[0].mxu0
        %v732 = vadd.f32 %v597, %v731
        %v733 = vpop.f32.mrb[0].mxu0
        %734 = vmatprep.mubr.f32.mxu0 0.0
        %735 = vmatmul.mubr.f32.gmra.mrb[0].mxu0 %v393
        %v736 = vpop.f32.mrb[0].mxu0
        %v737 = vadd.f32 %v596, %v736
        %v738 = vpop.f32.mrb[0].mxu0
        %739 = vmatprep.mubr.f32.mxu0 0.0
        %740 = vmatmul.mubr.f32.gmra.mrb[0].mxu0 %v394
        %v741 = vpop.f32.mrb[0].mxu0
        %v742 = vadd.f32 %v595, %v741
        %v743 = vpop.f32.mrb[0].mxu0
        %744 = vmatprep.mubr.f32.mxu0 0.0
        %745 = vmatmul.mubr.f32.gmra.mrb[0].mxu0 %v395
        %v746 = vpop.f32.mrb[0].mxu0
        %v747 = vadd.f32 %v594, %v746
        %v748 = vpop.f32.mrb[0].mxu0
        %749 = vmatprep.mubr.f32.mxu0 0.0
        %750 = vmatmul.mubr.f32.gmra.mrb[0].mxu0 %v396
        %v751 = vpop.f32.mrb[0].mxu0
        %v752 = vadd.f32 %v609, %v751
        %v753 = vpop.f32.mrb[0].mxu0
        %754 = vdwg.mxu0
        %s755 = scalar_lea.vmem %s1, 256
        %v756 = vld [vmem:[%s755] sm:$0xff]
        %v757 = vld [vmem:[%s755 + $0x8] sm:$0xff]
        %v758 = vld [vmem:[%s755 + $0x10] sm:$0xff]
        %v759 = vld [vmem:[%s755 + $0x18] sm:$0xff]
        %v760 = vld [vmem:[%s755 + $0x20] sm:$0xff]
        %v761 = vld [vmem:[%s755 + $0x28] sm:$0xff]
        %v762 = vld [vmem:[%s755 + $0x30] sm:$0xff]
        %v763 = vld [vmem:[%s755 + $0x38] sm:$0xff]
        %v764 = vld [vmem:[%s755 + $0x40] sm:$0xff]
        %v765 = vld [vmem:[%s755 + $0x48] sm:$0xff]
        %v766 = vld [vmem:[%s755 + $0x50] sm:$0xff]
        %v767 = vld [vmem:[%s755 + $0x58] sm:$0xff]
        %v768 = vld [vmem:[%s755 + $0x60] sm:$0xff]
        %v769 = vld [vmem:[%s755 + $0x68] sm:$0xff]
        %v770 = vld [vmem:[%s755 + $0x70] sm:$0xff]
        %v771 = vld [vmem:[%s755 + $0x78] sm:$0xff]
        %772 = vmatprep.subr.mxu0 0.0
        %773 = vmatpush1.msra.mxu0 %v756
        %774 = vmatprep.subr.mxu0 0.0
        %775 = vmatpush1.msra.mxu0 %v757
        %776 = vmatprep.subr.mxu0 0.0
        %777 = vmatpush1.msra.mxu0 %v758
        %778 = vmatprep.subr.mxu0 0.0
        %779 = vmatpush1.msra.mxu0 %v759
        %780 = vmatprep.subr.mxu0 0.0
        %781 = vmatpush1.msra.mxu0 %v760
        %782 = vmatprep.subr.mxu0 0.0
        %783 = vmatpush1.msra.mxu0 %v761
        %784 = vmatprep.subr.mxu0 0.0
        %785 = vmatpush1.msra.mxu0 %v762
        %786 = vmatprep.subr.mxu0 0.0
        %787 = vmatpush1.msra.mxu0 %v763
        %788 = vmatprep.subr.mxu0 0.0
        %789 = vmatpush1.msra.mxu0 %v764
        %790 = vmatprep.subr.mxu0 0.0
        %791 = vmatpush1.msra.mxu0 %v765
        %792 = vmatprep.subr.mxu0 0.0
        %793 = vmatpush1.msra.mxu0 %v766
        %794 = vmatprep.subr.mxu0 0.0
        %795 = vmatpush1.msra.mxu0 %v767
        %796 = vmatprep.subr.mxu0 0.0
        %797 = vmatpush1.msra.mxu0 %v768
        %798 = vmatprep.subr.mxu0 0.0
        %799 = vmatpush1.msra.mxu0 %v769
        %800 = vmatprep.subr.mxu0 0.0
        %801 = vmatpush1.msra.mxu0 %v770
        %802 = vmatprep.subr.mxu0 0.0
        %803 = vmatpush1.msra.mxu0 %v771
        %804 = vmatprep.subr.mxu0 0.0
        %805 = vmatpush1.msra.mxu0 0.0
        %806 = vmatprep.subr.mxu0 0.0
        %807 = vmatpush1.msra.mxu0 0.0
        %808 = vmatprep.subr.mxu0 0.0
        %809 = vmatpush1.msra.mxu0 0.0
        %810 = vmatprep.subr.mxu0 0.0
        %811 = vmatpush1.msra.mxu0 0.0
        %812 = vmatprep.subr.mxu0 0.0
        %813 = vmatpush1.msra.mxu0 0.0
        %814 = vmatprep.subr.mxu0 0.0
        %815 = vmatpush1.msra.mxu0 0.0
        %816 = vmatprep.subr.mxu0 0.0
        %817 = vmatpush1.msra.mxu0 0.0
        %818 = vmatprep.subr.mxu0 0.0
        %819 = vmatpush1.msra.mxu0 0.0
        %820 = vmatprep.subr.mxu0 0.0
        %821 = vmatpush1.msra.mxu0 0.0
        %822 = vmatprep.subr.mxu0 0.0
        %823 = vmatpush1.msra.mxu0 0.0
        %824 = vmatprep.subr.mxu0 0.0
        %825 = vmatpush1.msra.mxu0 0.0
        %826 = vmatprep.subr.mxu0 0.0
        %827 = vmatpush1.msra.mxu0 0.0
        %828 = vmatprep.subr.mxu0 0.0
        %829 = vmatpush1.msra.mxu0 0.0
        %830 = vmatprep.subr.mxu0 0.0
        %831 = vmatpush1.msra.mxu0 0.0
        %832 = vmatprep.subr.mxu0 0.0
        %833 = vmatpush1.msra.mxu0 0.0
        %834 = vmatprep.subr.mxu0 0.0
        %835 = vmatpush1.msra.mxu0 0.0
        %836 = vmatprep.mubr.f32.mxu0 0.0
        %837 = vmatmul.mubr.f32.gmra.mrb[0].mxu0 %v381
        %v838 = vpop.f32.mrb[0].mxu0
        %v839 = vadd.f32 0.0, %v838
        %v840 = vpop.f32.mrb[0].mxu0
        %841 = vmatprep.mubr.f32.mxu0 0.0
        %842 = vmatmul.mubr.f32.gmra.mrb[0].mxu0 %v382
        %v843 = vpop.f32.mrb[0].mxu0
        %v844 = vadd.f32 0.0, %v843
        %v845 = vpop.f32.mrb[0].mxu0
        %846 = vmatprep.mubr.f32.mxu0 0.0
        %847 = vmatmul.mubr.f32.gmra.mrb[0].mxu0 %v383
        %v848 = vpop.f32.mrb[0].mxu0
        %v849 = vadd.f32 0.0, %v848
        %v850 = vpop.f32.mrb[0].mxu0
        %851 = vmatprep.mubr.f32.mxu0 0.0
        %852 = vmatmul.mubr.f32.gmra.mrb[0].mxu0 %v384
        %v853 = vpop.f32.mrb[0].mxu0
        %v854 = vadd.f32 0.0, %v853
        %v855 = vpop.f32.mrb[0].mxu0
        %856 = vmatprep.mubr.f32.mxu0 0.0
        %857 = vmatmul.mubr.f32.gmra.mrb[0].mxu0 %v385
        %v858 = vpop.f32.mrb[0].mxu0
        %v859 = vadd.f32 0.0, %v858
        %v860 = vpop.f32.mrb[0].mxu0
        %861 = vmatprep.mubr.f32.mxu0 0.0
        %862 = vmatmul.mubr.f32.gmra.mrb[0].mxu0 %v386
        %v863 = vpop.f32.mrb[0].mxu0
        %v864 = vadd.f32 0.0, %v863
        %v865 = vpop.f32.mrb[0].mxu0
        %866 = vmatprep.mubr.f32.mxu0 0.0
        %867 = vmatmul.mubr.f32.gmra.mrb[0].mxu0 %v387
        %v868 = vpop.f32.mrb[0].mxu0
        %v869 = vadd.f32 0.0, %v868
        %v870 = vpop.f32.mrb[0].mxu0
        %871 = vmatprep.mubr.f32.mxu0 0.0
        %872 = vmatmul.mubr.f32.gmra.mrb[0].mxu0 %v388
        %v873 = vpop.f32.mrb[0].mxu0
        %v874 = vadd.f32 0.0, %v873
        %v875 = vpop.f32.mrb[0].mxu0
        %876 = vmatprep.mubr.f32.mxu0 0.0
        %877 = vmatmul.mubr.f32.gmra.mrb[0].mxu0 %v389
        %v878 = vpop.f32.mrb[0].mxu0
        %v879 = vadd.f32 0.0, %v878
        %v880 = vpop.f32.mrb[0].mxu0
        %881 = vmatprep.mubr.f32.mxu0 0.0
        %882 = vmatmul.mubr.f32.gmra.mrb[0].mxu0 %v390
        %v883 = vpop.f32.mrb[0].mxu0
        %v884 = vadd.f32 0.0, %v883
        %v885 = vpop.f32.mrb[0].mxu0
        %886 = vmatprep.mubr.f32.mxu0 0.0
        %887 = vmatmul.mubr.f32.gmra.mrb[0].mxu0 %v391
        %v888 = vpop.f32.mrb[0].mxu0
        %v889 = vadd.f32 0.0, %v888
        %v890 = vpop.f32.mrb[0].mxu0
        %891 = vmatprep.mubr.f32.mxu0 0.0
        %892 = vmatmul.mubr.f32.gmra.mrb[0].mxu0 %v392
        %v893 = vpop.f32.mrb[0].mxu0
        %v894 = vadd.f32 0.0, %v893
        %v895 = vpop.f32.mrb[0].mxu0
        %896 = vmatprep.mubr.f32.mxu0 0.0
        %897 = vmatmul.mubr.f32.gmra.mrb[0].mxu0 %v393
        %v898 = vpop.f32.mrb[0].mxu0
        %v899 = vadd.f32 0.0, %v898
        %v900 = vpop.f32.mrb[0].mxu0
        %901 = vmatprep.mubr.f32.mxu0 0.0
        %902 = vmatmul.mubr.f32.gmra.mrb[0].mxu0 %v394
        %v903 = vpop.f32.mrb[0].mxu0
        %v904 = vadd.f32 0.0, %v903
        %v905 = vpop.f32.mrb[0].mxu0
        %906 = vmatprep.mubr.f32.mxu0 0.0
        %907 = vmatmul.mubr.f32.gmra.mrb[0].mxu0 %v395
        %v908 = vpop.f32.mrb[0].mxu0
        %v909 = vadd.f32 0.0, %v908
        %v910 = vpop.f32.mrb[0].mxu0
        %911 = vmatprep.mubr.f32.mxu0 0.0
        %912 = vmatmul.mubr.f32.gmra.mrb[0].mxu0 %v396
        %v913 = vpop.f32.mrb[0].mxu0
        %v914 = vadd.f32 0.0, %v913
        %v915 = vpop.f32.mrb[0].mxu0
        %916 = vdwg.mxu0
        %v917 = vrot.slane %v839, 2
        %v918 = vrot.slane %v844, 2
        %v919 = vrot.slane %v849, 2
        %v920 = vrot.slane %v854, 2
        %v921 = vrot.slane %v859, 2
        %v922 = vrot.slane %v864, 2
        %v923 = vrot.slane %v869, 2
        %v924 = vrot.slane %v874, 2
        %v925 = vrot.slane %v879, 2
        %v926 = vrot.slane %v884, 2
        %v927 = vrot.slane %v889, 2
        %v928 = vrot.slane %v894, 2
        %v929 = vrot.slane %v899, 2
        %v930 = vrot.slane %v904, 2
        %v931 = vrot.slane %v909, 2
        %v932 = vrot.slane %v914, 2
        %vm933 = vcmp.lt.s32.totalorder %v592, 6
        %v934 = vsel %vm933, %v931, %v932
        %v935 = vsel %vm933, %v930, %v931
        %v936 = vsel %vm933, %v929, %v930
        %v937 = vsel %vm933, %v928, %v929
        %v938 = vsel %vm933, %v927, %v928
        %v939 = vsel %vm933, %v926, %v927
        %v940 = vsel %vm933, %v925, %v926
        %v941 = vsel %vm933, %v924, %v925
        %v942 = vsel %vm933, %v923, %v924
        %v943 = vsel %vm933, %v922, %v923
        %v944 = vsel %vm933, %v921, %v922
        %v945 = vsel %vm933, %v920, %v921
        %v946 = vsel %vm933, %v919, %v920
        %v947 = vsel %vm933, %v918, %v919
        %v948 = vsel %vm933, %v917, %v918
        %v949 = vsel %vm933, %v932, %v917
        %v950 = vadd.f32 %v677, %v948
        %v951 = vadd.f32 %v682, %v947
        %v952 = vadd.f32 %v687, %v946
        %v953 = vadd.f32 %v692, %v945
        %v954 = vadd.f32 %v697, %v944
        %v955 = vadd.f32 %v702, %v943
        %v956 = vadd.f32 %v707, %v942
        %v957 = vadd.f32 %v712, %v941
        %v958 = vadd.f32 %v717, %v940
        %v959 = vadd.f32 %v722, %v939
        %v960 = vadd.f32 %v727, %v938
        %v961 = vadd.f32 %v732, %v937
        %v962 = vadd.f32 %v737, %v936
        %v963 = vadd.f32 %v742, %v935
        %v964 = vadd.f32 %v747, %v934
        %v965 = vadd.f32 %v752, %v949
        %s966 = scalar_lea.vmem %s1, 384
        %v967 = vld [vmem:[%s966] sm:$0xff]
        %v968 = vld [vmem:[%s966 + $0x8] sm:$0xff]
        %v969 = vld [vmem:[%s966 + $0x10] sm:$0xff]
        %v970 = vld [vmem:[%s966 + $0x18] sm:$0xff]
        %v971 = vld [vmem:[%s966 + $0x20] sm:$0xff]
        %v972 = vld [vmem:[%s966 + $0x28] sm:$0xff]
        %v973 = vld [vmem:[%s966 + $0x30] sm:$0xff]
        %v974 = vld [vmem:[%s966 + $0x38] sm:$0xff]
        %v975 = vld [vmem:[%s966 + $0x40] sm:$0xff]
        %v976 = vld [vmem:[%s966 + $0x48] sm:$0xff]
        %v977 = vld [vmem:[%s966 + $0x50] sm:$0xff]
        %v978 = vld [vmem:[%s966 + $0x58] sm:$0xff]
        %v979 = vld [vmem:[%s966 + $0x60] sm:$0xff]
        %v980 = vld [vmem:[%s966 + $0x68] sm:$0xff]
        %v981 = vld [vmem:[%s966 + $0x70] sm:$0xff]
        %v982 = vld [vmem:[%s966 + $0x78] sm:$0xff]
        %983 = vmatprep.subr.mxu0 0.0
        %984 = vmatpush1.msra.mxu0 %v967
        %985 = vmatprep.subr.mxu0 0.0
        %986 = vmatpush1.msra.mxu0 %v968
        %987 = vmatprep.subr.mxu0 0.0
        %988 = vmatpush1.msra.mxu0 %v969
        %989 = vmatprep.subr.mxu0 0.0
        %990 = vmatpush1.msra.mxu0 %v970
        %991 = vmatprep.subr.mxu0 0.0
        %992 = vmatpush1.msra.mxu0 %v971
        %993 = vmatprep.subr.mxu0 0.0
        %994 = vmatpush1.msra.mxu0 %v972
        %995 = vmatprep.subr.mxu0 0.0
        %996 = vmatpush1.msra.mxu0 %v973
        %997 = vmatprep.subr.mxu0 0.0
        %998 = vmatpush1.msra.mxu0 %v974
        %999 = vmatprep.subr.mxu0 0.0
        %1000 = vmatpush1.msra.mxu0 %v975
        %1001 = vmatprep.subr.mxu0 0.0
        %1002 = vmatpush1.msra.mxu0 %v976
        %1003 = vmatprep.subr.mxu0 0.0
        %1004 = vmatpush1.msra.mxu0 %v977
        %1005 = vmatprep.subr.mxu0 0.0
        %1006 = vmatpush1.msra.mxu0 %v978
        %1007 = vmatprep.subr.mxu0 0.0
        %1008 = vmatpush1.msra.mxu0 %v979
        %1009 = vmatprep.subr.mxu0 0.0
        %1010 = vmatpush1.msra.mxu0 %v980
        %1011 = vmatprep.subr.mxu0 0.0
        %1012 = vmatpush1.msra.mxu0 %v981
        %1013 = vmatprep.subr.mxu0 0.0
        %1014 = vmatpush1.msra.mxu0 %v982
        %1015 = vmatprep.subr.mxu0 0.0
        %1016 = vmatpush1.msra.mxu0 0.0
        %1017 = vmatprep.subr.mxu0 0.0
        %1018 = vmatpush1.msra.mxu0 0.0
        %1019 = vmatprep.subr.mxu0 0.0
        %1020 = vmatpush1.msra.mxu0 0.0
        %1021 = vmatprep.subr.mxu0 0.0
        %1022 = vmatpush1.msra.mxu0 0.0
        %1023 = vmatprep.subr.mxu0 0.0
        %1024 = vmatpush1.msra.mxu0 0.0
        %1025 = vmatprep.subr.mxu0 0.0
        %1026 = vmatpush1.msra.mxu0 0.0
        %1027 = vmatprep.subr.mxu0 0.0
        %1028 = vmatpush1.msra.mxu0 0.0
        %1029 = vmatprep.subr.mxu0 0.0
        %1030 = vmatpush1.msra.mxu0 0.0
        %1031 = vmatprep.subr.mxu0 0.0
        %1032 = vmatpush1.msra.mxu0 0.0
        %1033 = vmatprep.subr.mxu0 0.0
        %1034 = vmatpush1.msra.mxu0 0.0
        %1035 = vmatprep.subr.mxu0 0.0
        %1036 = vmatpush1.msra.mxu0 0.0
        %1037 = vmatprep.subr.mxu0 0.0
        %1038 = vmatpush1.msra.mxu0 0.0
        %1039 = vmatprep.subr.mxu0 0.0
        %1040 = vmatpush1.msra.mxu0 0.0
        %1041 = vmatprep.subr.mxu0 0.0
        %1042 = vmatpush1.msra.mxu0 0.0
        %1043 = vmatprep.subr.mxu0 0.0
        %1044 = vmatpush1.msra.mxu0 0.0
        %1045 = vmatprep.subr.mxu0 0.0
        %1046 = vmatpush1.msra.mxu0 0.0
        %1047 = vmatprep.mubr.f32.mxu0 0.0
        %1048 = vmatmul.mubr.f32.gmra.mrb[0].mxu0 %v381
        %v1049 = vpop.f32.mrb[0].mxu0
        %v1050 = vadd.f32 0.0, %v1049
        %v1051 = vpop.f32.mrb[0].mxu0
        %1052 = vmatprep.mubr.f32.mxu0 0.0
        %1053 = vmatmul.mubr.f32.gmra.mrb[0].mxu0 %v382
        %v1054 = vpop.f32.mrb[0].mxu0
        %v1055 = vadd.f32 0.0, %v1054
        %v1056 = vpop.f32.mrb[0].mxu0
        %1057 = vmatprep.mubr.f32.mxu0 0.0
        %1058 = vmatmul.mubr.f32.gmra.mrb[0].mxu0 %v383
        %v1059 = vpop.f32.mrb[0].mxu0
        %v1060 = vadd.f32 0.0, %v1059
        %v1061 = vpop.f32.mrb[0].mxu0
        %1062 = vmatprep.mubr.f32.mxu0 0.0
        %1063 = vmatmul.mubr.f32.gmra.mrb[0].mxu0 %v384
        %v1064 = vpop.f32.mrb[0].mxu0
        %v1065 = vadd.f32 0.0, %v1064
        %v1066 = vpop.f32.mrb[0].mxu0
        %1067 = vmatprep.mubr.f32.mxu0 0.0
        %1068 = vmatmul.mubr.f32.gmra.mrb[0].mxu0 %v385
        %v1069 = vpop.f32.mrb[0].mxu0
        %v1070 = vadd.f32 0.0, %v1069
        %v1071 = vpop.f32.mrb[0].mxu0
        %1072 = vmatprep.mubr.f32.mxu0 0.0
        %1073 = vmatmul.mubr.f32.gmra.mrb[0].mxu0 %v386
        %v1074 = vpop.f32.mrb[0].mxu0
        %v1075 = vadd.f32 0.0, %v1074
        %v1076 = vpop.f32.mrb[0].mxu0
        %1077 = vmatprep.mubr.f32.mxu0 0.0
        %1078 = vmatmul.mubr.f32.gmra.mrb[0].mxu0 %v387
        %v1079 = vpop.f32.mrb[0].mxu0
        %v1080 = vadd.f32 0.0, %v1079
        %v1081 = vpop.f32.mrb[0].mxu0
        %1082 = vmatprep.mubr.f32.mxu0 0.0
        %1083 = vmatmul.mubr.f32.gmra.mrb[0].mxu0 %v388
        %v1084 = vpop.f32.mrb[0].mxu0
        %v1085 = vadd.f32 0.0, %v1084
        %v1086 = vpop.f32.mrb[0].mxu0
        %1087 = vmatprep.mubr.f32.mxu0 0.0
        %1088 = vmatmul.mubr.f32.gmra.mrb[0].mxu0 %v389
        %v1089 = vpop.f32.mrb[0].mxu0
        %v1090 = vadd.f32 0.0, %v1089
        %v1091 = vpop.f32.mrb[0].mxu0
        %1092 = vmatprep.mubr.f32.mxu0 0.0
        %1093 = vmatmul.mubr.f32.gmra.mrb[0].mxu0 %v390
        %v1094 = vpop.f32.mrb[0].mxu0
        %v1095 = vadd.f32 0.0, %v1094
        %v1096 = vpop.f32.mrb[0].mxu0
        %1097 = vmatprep.mubr.f32.mxu0 0.0
        %1098 = vmatmul.mubr.f32.gmra.mrb[0].mxu0 %v391
        %v1099 = vpop.f32.mrb[0].mxu0
        %v1100 = vadd.f32 0.0, %v1099
        %v1101 = vpop.f32.mrb[0].mxu0
        %1102 = vmatprep.mubr.f32.mxu0 0.0
        %1103 = vmatmul.mubr.f32.gmra.mrb[0].mxu0 %v392
        %v1104 = vpop.f32.mrb[0].mxu0
        %v1105 = vadd.f32 0.0, %v1104
        %v1106 = vpop.f32.mrb[0].mxu0
        %1107 = vmatprep.mubr.f32.mxu0 0.0
        %1108 = vmatmul.mubr.f32.gmra.mrb[0].mxu0 %v393
        %v1109 = vpop.f32.mrb[0].mxu0
        %v1110 = vadd.f32 0.0, %v1109
        %v1111 = vpop.f32.mrb[0].mxu0
        %1112 = vmatprep.mubr.f32.mxu0 0.0
        %1113 = vmatmul.mubr.f32.gmra.mrb[0].mxu0 %v394
        %v1114 = vpop.f32.mrb[0].mxu0
        %v1115 = vadd.f32 0.0, %v1114
        %v1116 = vpop.f32.mrb[0].mxu0
        %1117 = vmatprep.mubr.f32.mxu0 0.0
        %1118 = vmatmul.mubr.f32.gmra.mrb[0].mxu0 %v395
        %v1119 = vpop.f32.mrb[0].mxu0
        %v1120 = vadd.f32 0.0, %v1119
        %v1121 = vpop.f32.mrb[0].mxu0
        %1122 = vmatprep.mubr.f32.mxu0 0.0
        %1123 = vmatmul.mubr.f32.gmra.mrb[0].mxu0 %v396
        %v1124 = vpop.f32.mrb[0].mxu0
        %v1125 = vadd.f32 0.0, %v1124
        %v1126 = vpop.f32.mrb[0].mxu0
        %1127 = vdwg.mxu0
        %v1128 = vrot.slane %v1050, 3
        %v1129 = vrot.slane %v1055, 3
        %v1130 = vrot.slane %v1060, 3
        %v1131 = vrot.slane %v1065, 3
        %v1132 = vrot.slane %v1070, 3
        %v1133 = vrot.slane %v1075, 3
        %v1134 = vrot.slane %v1080, 3
        %v1135 = vrot.slane %v1085, 3
        %v1136 = vrot.slane %v1090, 3
        %v1137 = vrot.slane %v1095, 3
        %v1138 = vrot.slane %v1100, 3
        %v1139 = vrot.slane %v1105, 3
        %v1140 = vrot.slane %v1110, 3
        %v1141 = vrot.slane %v1115, 3
        %v1142 = vrot.slane %v1120, 3
        %v1143 = vrot.slane %v1125, 3
        %vm1144 = vcmp.lt.s32.totalorder %v592, 5
        %v1145 = vsel %vm1144, %v1142, %v1143
        %v1146 = vsel %vm1144, %v1141, %v1142
        %v1147 = vsel %vm1144, %v1140, %v1141
        %v1148 = vsel %vm1144, %v1139, %v1140
        %v1149 = vsel %vm1144, %v1138, %v1139
        %v1150 = vsel %vm1144, %v1137, %v1138
        %v1151 = vsel %vm1144, %v1136, %v1137
        %v1152 = vsel %vm1144, %v1135, %v1136
        %v1153 = vsel %vm1144, %v1134, %v1135
        %v1154 = vsel %vm1144, %v1133, %v1134
        %v1155 = vsel %vm1144, %v1132, %v1133
        %v1156 = vsel %vm1144, %v1131, %v1132
        %v1157 = vsel %vm1144, %v1130, %v1131
        %v1158 = vsel %vm1144, %v1129, %v1130
        %v1159 = vsel %vm1144, %v1128, %v1129
        %v1160 = vsel %vm1144, %v1143, %v1128
        %v1161 = vadd.f32 %v950, %v1159
        %v1162 = vadd.f32 %v951, %v1158
        %v1163 = vadd.f32 %v952, %v1157
        %v1164 = vadd.f32 %v953, %v1156
        %v1165 = vadd.f32 %v954, %v1155
        %v1166 = vadd.f32 %v955, %v1154
        %v1167 = vadd.f32 %v956, %v1153
        %v1168 = vadd.f32 %v957, %v1152
        %v1169 = vadd.f32 %v958, %v1151
        %v1170 = vadd.f32 %v959, %v1150
        %v1171 = vadd.f32 %v960, %v1149
        %v1172 = vadd.f32 %v961, %v1148
        %v1173 = vadd.f32 %v962, %v1147
        %v1174 = vadd.f32 %v963, %v1146
        %v1175 = vadd.f32 %v964, %v1145
        %v1176 = vadd.f32 %v965, %v1160
        %s1177 = scalar_lea.vmem %s1, 512
        %v1178 = vld [vmem:[%s1177] sm:$0xff]
        %v1179 = vld [vmem:[%s1177 + $0x8] sm:$0xff]
        %v1180 = vld [vmem:[%s1177 + $0x10] sm:$0xff]
        %v1181 = vld [vmem:[%s1177 + $0x18] sm:$0xff]
        %v1182 = vld [vmem:[%s1177 + $0x20] sm:$0xff]
        %v1183 = vld [vmem:[%s1177 + $0x28] sm:$0xff]
        %v1184 = vld [vmem:[%s1177 + $0x30] sm:$0xff]
        %v1185 = vld [vmem:[%s1177 + $0x38] sm:$0xff]
        %v1186 = vld [vmem:[%s1177 + $0x40] sm:$0xff]
        %v1187 = vld [vmem:[%s1177 + $0x48] sm:$0xff]
        %v1188 = vld [vmem:[%s1177 + $0x50] sm:$0xff]
        %v1189 = vld [vmem:[%s1177 + $0x58] sm:$0xff]
        %v1190 = vld [vmem:[%s1177 + $0x60] sm:$0xff]
        %v1191 = vld [vmem:[%s1177 + $0x68] sm:$0xff]
        %v1192 = vld [vmem:[%s1177 + $0x70] sm:$0xff]
        %v1193 = vld [vmem:[%s1177 + $0x78] sm:$0xff]
        %1194 = vmatprep.subr.mxu0 0.0
        %1195 = vmatpush1.msra.mxu0 %v1178
        %1196 = vmatprep.subr.mxu0 0.0
        %1197 = vmatpush1.msra.mxu0 %v1179
        %1198 = vmatprep.subr.mxu0 0.0
        %1199 = vmatpush1.msra.mxu0 %v1180
        %1200 = vmatprep.subr.mxu0 0.0
        %1201 = vmatpush1.msra.mxu0 %v1181
        %1202 = vmatprep.subr.mxu0 0.0
        %1203 = vmatpush1.msra.mxu0 %v1182
        %1204 = vmatprep.subr.mxu0 0.0
        %1205 = vmatpush1.msra.mxu0 %v1183
        %1206 = vmatprep.subr.mxu0 0.0
        %1207 = vmatpush1.msra.mxu0 %v1184
        %1208 = vmatprep.subr.mxu0 0.0
        %1209 = vmatpush1.msra.mxu0 %v1185
        %1210 = vmatprep.subr.mxu0 0.0
        %1211 = vmatpush1.msra.mxu0 %v1186
        %1212 = vmatprep.subr.mxu0 0.0
        %1213 = vmatpush1.msra.mxu0 %v1187
        %1214 = vmatprep.subr.mxu0 0.0
        %1215 = vmatpush1.msra.mxu0 %v1188
        %1216 = vmatprep.subr.mxu0 0.0
        %1217 = vmatpush1.msra.mxu0 %v1189
        %1218 = vmatprep.subr.mxu0 0.0
        %1219 = vmatpush1.msra.mxu0 %v1190
        %1220 = vmatprep.subr.mxu0 0.0
        %1221 = vmatpush1.msra.mxu0 %v1191
        %1222 = vmatprep.subr.mxu0 0.0
        %1223 = vmatpush1.msra.mxu0 %v1192
        %1224 = vmatprep.subr.mxu0 0.0
        %1225 = vmatpush1.msra.mxu0 %v1193
        %1226 = vmatprep.subr.mxu0 0.0
        %1227 = vmatpush1.msra.mxu0 0.0
        %1228 = vmatprep.subr.mxu0 0.0
        %1229 = vmatpush1.msra.mxu0 0.0
        %1230 = vmatprep.subr.mxu0 0.0
        %1231 = vmatpush1.msra.mxu0 0.0
        %1232 = vmatprep.subr.mxu0 0.0
        %1233 = vmatpush1.msra.mxu0 0.0
        %1234 = vmatprep.subr.mxu0 0.0
        %1235 = vmatpush1.msra.mxu0 0.0
        %1236 = vmatprep.subr.mxu0 0.0
        %1237 = vmatpush1.msra.mxu0 0.0
        %1238 = vmatprep.subr.mxu0 0.0
        %1239 = vmatpush1.msra.mxu0 0.0
        %1240 = vmatprep.subr.mxu0 0.0
        %1241 = vmatpush1.msra.mxu0 0.0
        %1242 = vmatprep.subr.mxu0 0.0
        %1243 = vmatpush1.msra.mxu0 0.0
        %1244 = vmatprep.subr.mxu0 0.0
        %1245 = vmatpush1.msra.mxu0 0.0
        %1246 = vmatprep.subr.mxu0 0.0
        %1247 = vmatpush1.msra.mxu0 0.0
        %1248 = vmatprep.subr.mxu0 0.0
        %1249 = vmatpush1.msra.mxu0 0.0
        %1250 = vmatprep.subr.mxu0 0.0
        %1251 = vmatpush1.msra.mxu0 0.0
        %1252 = vmatprep.subr.mxu0 0.0
        %1253 = vmatpush1.msra.mxu0 0.0
        %1254 = vmatprep.subr.mxu0 0.0
        %1255 = vmatpush1.msra.mxu0 0.0
        %1256 = vmatprep.subr.mxu0 0.0
        %1257 = vmatpush1.msra.mxu0 0.0
        %1258 = vmatprep.mubr.f32.mxu0 0.0
        %1259 = vmatmul.mubr.f32.gmra.mrb[0].mxu0 %v381
        %v1260 = vpop.f32.mrb[0].mxu0
        %v1261 = vadd.f32 0.0, %v1260
        %v1262 = vpop.f32.mrb[0].mxu0
        %1263 = vmatprep.mubr.f32.mxu0 0.0
        %1264 = vmatmul.mubr.f32.gmra.mrb[0].mxu0 %v382
        %v1265 = vpop.f32.mrb[0].mxu0
        %v1266 = vadd.f32 0.0, %v1265
        %v1267 = vpop.f32.mrb[0].mxu0
        %1268 = vmatprep.mubr.f32.mxu0 0.0
        %1269 = vmatmul.mubr.f32.gmra.mrb[0].mxu0 %v383
        %v1270 = vpop.f32.mrb[0].mxu0
        %v1271 = vadd.f32 0.0, %v1270
        %v1272 = vpop.f32.mrb[0].mxu0
        %1273 = vmatprep.mubr.f32.mxu0 0.0
        %1274 = vmatmul.mubr.f32.gmra.mrb[0].mxu0 %v384
        %v1275 = vpop.f32.mrb[0].mxu0
        %v1276 = vadd.f32 0.0, %v1275
        %v1277 = vpop.f32.mrb[0].mxu0
        %1278 = vmatprep.mubr.f32.mxu0 0.0
        %1279 = vmatmul.mubr.f32.gmra.mrb[0].mxu0 %v385
        %v1280 = vpop.f32.mrb[0].mxu0
        %v1281 = vadd.f32 0.0, %v1280
        %v1282 = vpop.f32.mrb[0].mxu0
        %1283 = vmatprep.mubr.f32.mxu0 0.0
        %1284 = vmatmul.mubr.f32.gmra.mrb[0].mxu0 %v386
        %v1285 = vpop.f32.mrb[0].mxu0
        %v1286 = vadd.f32 0.0, %v1285
        %v1287 = vpop.f32.mrb[0].mxu0
        %1288 = vmatprep.mubr.f32.mxu0 0.0
        %1289 = vmatmul.mubr.f32.gmra.mrb[0].mxu0 %v387
        %v1290 = vpop.f32.mrb[0].mxu0
        %v1291 = vadd.f32 0.0, %v1290
        %v1292 = vpop.f32.mrb[0].mxu0
        %1293 = vmatprep.mubr.f32.mxu0 0.0
        %1294 = vmatmul.mubr.f32.gmra.mrb[0].mxu0 %v388
        %v1295 = vpop.f32.mrb[0].mxu0
        %v1296 = vadd.f32 0.0, %v1295
        %v1297 = vpop.f32.mrb[0].mxu0
        %1298 = vmatprep.mubr.f32.mxu0 0.0
        %1299 = vmatmul.mubr.f32.gmra.mrb[0].mxu0 %v389
        %v1300 = vpop.f32.mrb[0].mxu0
        %v1301 = vadd.f32 0.0, %v1300
        %v1302 = vpop.f32.mrb[0].mxu0
        %1303 = vmatprep.mubr.f32.mxu0 0.0
        %1304 = vmatmul.mubr.f32.gmra.mrb[0].mxu0 %v390
        %v1305 = vpop.f32.mrb[0].mxu0
        %v1306 = vadd.f32 0.0, %v1305
        %v1307 = vpop.f32.mrb[0].mxu0
        %1308 = vmatprep.mubr.f32.mxu0 0.0
        %1309 = vmatmul.mubr.f32.gmra.mrb[0].mxu0 %v391
        %v1310 = vpop.f32.mrb[0].mxu0
        %v1311 = vadd.f32 0.0, %v1310
        %v1312 = vpop.f32.mrb[0].mxu0
        %1313 = vmatprep.mubr.f32.mxu0 0.0
        %1314 = vmatmul.mubr.f32.gmra.mrb[0].mxu0 %v392
        %v1315 = vpop.f32.mrb[0].mxu0
        %v1316 = vadd.f32 0.0, %v1315
        %v1317 = vpop.f32.mrb[0].mxu0
        %1318 = vmatprep.mubr.f32.mxu0 0.0
        %1319 = vmatmul.mubr.f32.gmra.mrb[0].mxu0 %v393
        %v1320 = vpop.f32.mrb[0].mxu0
        %v1321 = vadd.f32 0.0, %v1320
        %v1322 = vpop.f32.mrb[0].mxu0
        %1323 = vmatprep.mubr.f32.mxu0 0.0
        %1324 = vmatmul.mubr.f32.gmra.mrb[0].mxu0 %v394
        %v1325 = vpop.f32.mrb[0].mxu0
        %v1326 = vadd.f32 0.0, %v1325
        %v1327 = vpop.f32.mrb[0].mxu0
        %1328 = vmatprep.mubr.f32.mxu0 0.0
        %1329 = vmatmul.mubr.f32.gmra.mrb[0].mxu0 %v395
        %v1330 = vpop.f32.mrb[0].mxu0
        %v1331 = vadd.f32 0.0, %v1330
        %v1332 = vpop.f32.mrb[0].mxu0
        %1333 = vmatprep.mubr.f32.mxu0 0.0
        %1334 = vmatmul.mubr.f32.gmra.mrb[0].mxu0 %v396
        %v1335 = vpop.f32.mrb[0].mxu0
        %v1336 = vadd.f32 0.0, %v1335
        %v1337 = vpop.f32.mrb[0].mxu0
        %1338 = vdwg.mxu0
        %v1339 = vrot.slane %v1261, 4
        %v1340 = vrot.slane %v1266, 4
        %v1341 = vrot.slane %v1271, 4
        %v1342 = vrot.slane %v1276, 4
        %v1343 = vrot.slane %v1281, 4
        %v1344 = vrot.slane %v1286, 4
        %v1345 = vrot.slane %v1291, 4
        %v1346 = vrot.slane %v1296, 4
        %v1347 = vrot.slane %v1301, 4
        %v1348 = vrot.slane %v1306, 4
        %v1349 = vrot.slane %v1311, 4
        %v1350 = vrot.slane %v1316, 4
        %v1351 = vrot.slane %v1321, 4
        %v1352 = vrot.slane %v1326, 4
        %v1353 = vrot.slane %v1331, 4
        %v1354 = vrot.slane %v1336, 4
        %vm1355 = vcmp.lt.s32.totalorder %v592, 4
        %v1356 = vsel %vm1355, %v1353, %v1354
        %v1357 = vsel %vm1355, %v1352, %v1353
        %v1358 = vsel %vm1355, %v1351, %v1352
        %v1359 = vsel %vm1355, %v1350, %v1351
        %v1360 = vsel %vm1355, %v1349, %v1350
        %v1361 = vsel %vm1355, %v1348, %v1349
        %v1362 = vsel %vm1355, %v1347, %v1348
        %v1363 = vsel %vm1355, %v1346, %v1347
        %v1364 = vsel %vm1355, %v1345, %v1346
        %v1365 = vsel %vm1355, %v1344, %v1345
        %v1366 = vsel %vm1355, %v1343, %v1344
        %v1367 = vsel %vm1355, %v1342, %v1343
        %v1368 = vsel %vm1355, %v1341, %v1342
        %v1369 = vsel %vm1355, %v1340, %v1341
        %v1370 = vsel %vm1355, %v1339, %v1340
        %v1371 = vsel %vm1355, %v1354, %v1339
        %v1372 = vadd.f32 %v1161, %v1370
        %v1373 = vadd.f32 %v1162, %v1369
        %v1374 = vadd.f32 %v1163, %v1368
        %v1375 = vadd.f32 %v1164, %v1367
        %v1376 = vadd.f32 %v1165, %v1366
        %v1377 = vadd.f32 %v1166, %v1365
        %v1378 = vadd.f32 %v1167, %v1364
        %v1379 = vadd.f32 %v1168, %v1363
        %v1380 = vadd.f32 %v1169, %v1362
        %v1381 = vadd.f32 %v1170, %v1361
        %v1382 = vadd.f32 %v1171, %v1360
        %v1383 = vadd.f32 %v1172, %v1359
        %v1384 = vadd.f32 %v1173, %v1358
        %v1385 = vadd.f32 %v1174, %v1357
        %v1386 = vadd.f32 %v1175, %v1356
        %v1387 = vadd.f32 %v1176, %v1371
        %v1388 = vadd.s32 %v592, 8
        %vm1389 = vcmp.lt.s32.totalorder %v592, 8
        %vm1390 = vcmp.lt.s32.totalorder %v1388, 8
        %v1391 = vsel %vm1389, 1, 0
        %v1392 = vsel %vm1390, 1, 0
        %vm1393 = vcmp.eq.s32.totalorder %v1391, 1
        %vm1394 = vcmp.eq.s32.totalorder %v1392, 1
        %v1395 = vsel %vm1393, %v1372, -inf
        %v1396 = vsel %vm1394, %v1373, -inf
        %v1397 = vsel %vm1393, %v1374, -inf
        %v1398 = vsel %vm1394, %v1375, -inf
        %v1399 = vsel %vm1393, %v1376, -inf
        %v1400 = vsel %vm1394, %v1377, -inf
        %v1401 = vsel %vm1393, %v1378, -inf
        %v1402 = vsel %vm1394, %v1379, -inf
        %v1403 = vsel %vm1393, %v1380, -inf
        %v1404 = vsel %vm1394, %v1381, -inf
        %v1405 = vsel %vm1393, %v1382, -inf
        %v1406 = vsel %vm1394, %v1383, -inf
        %v1407 = vsel %vm1393, %v1384, -inf
        %v1408 = vsel %vm1394, %v1385, -inf
        %v1409 = vsel %vm1393, %v1386, -inf
        %v1410 = vsel %vm1394, %v1387, -inf
        %vm1411 = vcmask 523264
        %v1412 = vsel %vm1411, %v1395, -inf
        %v1413 = vsel %vm1411, %v1396, -inf
        %v1414 = vmax.f32 %v1412, %v1413
        %v1415 = vrot.slane %v1414, 4
        %v1416 = vmax.f32 %v1414, %v1415
        %v1417 = vrot.slane %v1416, 2
        %v1418 = vmax.f32 %v1416, %v1417
        %v1419 = vrot.slane %v1418, 1
        %v1420 = vmax.f32 %v1418, %v1419
        %v1421 = vsel %vm1411, %v1397, -inf
        %v1422 = vsel %vm1411, %v1398, -inf
        %v1423 = vmax.f32 %v1421, %v1422
        %v1424 = vrot.slane %v1423, 4
        %v1425 = vmax.f32 %v1423, %v1424
        %v1426 = vrot.slane %v1425, 2
        %v1427 = vmax.f32 %v1425, %v1426
        %v1428 = vrot.slane %v1427, 1
        %v1429 = vmax.f32 %v1427, %v1428
        %v1430 = vsel %vm1411, %v1399, -inf
        %v1431 = vsel %vm1411, %v1400, -inf
        %v1432 = vmax.f32 %v1430, %v1431
        %v1433 = vrot.slane %v1432, 4
        %v1434 = vmax.f32 %v1432, %v1433
        %v1435 = vrot.slane %v1434, 2
        %v1436 = vmax.f32 %v1434, %v1435
        %v1437 = vrot.slane %v1436, 1
        %v1438 = vmax.f32 %v1436, %v1437
        %v1439 = vsel %vm1411, %v1401, -inf
        %v1440 = vsel %vm1411, %v1402, -inf
        %v1441 = vmax.f32 %v1439, %v1440
        %v1442 = vrot.slane %v1441, 4
        %v1443 = vmax.f32 %v1441, %v1442
        %v1444 = vrot.slane %v1443, 2
        %v1445 = vmax.f32 %v1443, %v1444
        %v1446 = vrot.slane %v1445, 1
        %v1447 = vmax.f32 %v1445, %v1446
        %v1448 = vsel %vm1411, %v1403, -inf
        %v1449 = vsel %vm1411, %v1404, -inf
        %v1450 = vmax.f32 %v1448, %v1449
        %v1451 = vrot.slane %v1450, 4
        %v1452 = vmax.f32 %v1450, %v1451
        %v1453 = vrot.slane %v1452, 2
        %v1454 = vmax.f32 %v1452, %v1453
        %v1455 = vrot.slane %v1454, 1
        %v1456 = vmax.f32 %v1454, %v1455
        %v1457 = vsel %vm1411, %v1405, -inf
        %v1458 = vsel %vm1411, %v1406, -inf
        %v1459 = vmax.f32 %v1457, %v1458
        %v1460 = vrot.slane %v1459, 4
        %v1461 = vmax.f32 %v1459, %v1460
        %v1462 = vrot.slane %v1461, 2
        %v1463 = vmax.f32 %v1461, %v1462
        %v1464 = vrot.slane %v1463, 1
        %v1465 = vmax.f32 %v1463, %v1464
        %v1466 = vsel %vm1411, %v1407, -inf
        %v1467 = vsel %vm1411, %v1408, -inf
        %v1468 = vmax.f32 %v1466, %v1467
        %v1469 = vrot.slane %v1468, 4
        %v1470 = vmax.f32 %v1468, %v1469
        %v1471 = vrot.slane %v1470, 2
        %v1472 = vmax.f32 %v1470, %v1471
        %v1473 = vrot.slane %v1472, 1
        %v1474 = vmax.f32 %v1472, %v1473
        %v1475 = vsel %vm1411, %v1409, -inf
        %v1476 = vsel %vm1411, %v1410, -inf
        %v1477 = vmax.f32 %v1475, %v1476
        %v1478 = vrot.slane %v1477, 4
        %v1479 = vmax.f32 %v1477, %v1478
        %v1480 = vrot.slane %v1479, 2
        %v1481 = vmax.f32 %v1479, %v1480
        %v1482 = vrot.slane %v1481, 1
        %v1483 = vmax.f32 %v1481, %v1482
        %v1484 = vld [vmem:[%s2] sm:$0x1]
        %v1486 = vlaneseq
        %v1487 = vshrl.u32 %v1486, 7
        %v1488 = vsub.s32 0, %v1487
        %v1489 = vrot.slane %v1484, %v1488
        %v1491 = vadd.f32 %v1420, %v1489
        %v1492 = vadd.f32 %v1429, %v1489
        %v1493 = vadd.f32 %v1438, %v1489
        %v1494 = vadd.f32 %v1447, %v1489
        %v1495 = vadd.f32 %v1456, %v1489
        %v1496 = vadd.f32 %v1465, %v1489
        %v1497 = vadd.f32 %v1474, %v1489
        %v1498 = vadd.f32 %v1483, %v1489
        %v1499 = vmax.f32 %v1491, 0.0
        %v1500 = vmax.f32 %v1492, 0.0
        %v1501 = vmax.f32 %v1493, 0.0
        %v1502 = vmax.f32 %v1494, 0.0
        %v1503 = vmax.f32 %v1495, 0.0
        %v1504 = vmax.f32 %v1496, 0.0
        %v1505 = vmax.f32 %v1497, 0.0
        %v1506 = vmax.f32 %v1498, 0.0
        %v1507 = vld [vmem:[%s3] sm:$0xff]
        %v1508 = vld [vmem:[%s3 + $0x8] sm:$0xff]
        %v1509 = vld [vmem:[%s3 + $0x10] sm:$0xff]
        %v1510 = vld [vmem:[%s3 + $0x18] sm:$0xff]
        %v1511 = vld [vmem:[%s3 + $0x20] sm:$0xff]
        %v1512 = vld [vmem:[%s3 + $0x28] sm:$0xff]
        %v1513 = vld [vmem:[%s3 + $0x30] sm:$0xff]
        %v1514 = vld [vmem:[%s3 + $0x38] sm:$0xff]
        %v1515 = vld [vmem:[%s4] sm:$0x1]
        %v1517 = vlaneseq
        %v1518 = vshrl.u32 %v1517, 7
        %v1519 = vsub.s32 0, %v1518
        %v1520 = vrot.slane %v1515, %v1519
        %v1530 = vrot.slane %v1500, 7
        %vm1531 = vcmask 1041409
        %v1532 = vsel %vm1531, %v1530, %v1499
        %v1533 = vrot.slane %v1501, 6
        %vm1534 = vcmask 1042434
        %v1535 = vsel %vm1534, %v1533, %v1532
        %v1536 = vrot.slane %v1502, 5
        %vm1537 = vcmask 1043459
        %v1538 = vsel %vm1537, %v1536, %v1535
        %v1539 = vrot.slane %v1503, 4
        %vm1540 = vcmask 1044484
        %v1541 = vsel %vm1540, %v1539, %v1538
        %v1542 = vrot.slane %v1504, 3
        %vm1543 = vcmask 1045509
        %v1544 = vsel %vm1543, %v1542, %v1541
        %v1545 = vrot.slane %v1505, 2
        %vm1546 = vcmask 1046534
        %v1547 = vsel %vm1546, %v1545, %v1544
        %v1548 = vrot.slane %v1506, 1
        %vm1549 = vcmask 1047559
        %v1550 = vsel %vm1549, %v1548, %v1547
        %v1551 = vsel %vm1411, %v1550, 0
        %1553 = vmatprep.subr.mxu0 0.0
        %1554 = vmatpush1.msra.mxu0 %v1507
        %1555 = vmatprep.subr.mxu0 0.0
        %1556 = vmatpush1.msra.mxu0 %v1508
        %1557 = vmatprep.subr.mxu0 0.0
        %1558 = vmatpush1.msra.mxu0 %v1509
        %1559 = vmatprep.subr.mxu0 0.0
        %1560 = vmatpush1.msra.mxu0 %v1510
        %1561 = vmatprep.subr.mxu0 0.0
        %1562 = vmatpush1.msra.mxu0 %v1511
        %1563 = vmatprep.subr.mxu0 0.0
        %1564 = vmatpush1.msra.mxu0 %v1512
        %1565 = vmatprep.subr.mxu0 0.0
        %1566 = vmatpush1.msra.mxu0 %v1513
        %1567 = vmatprep.subr.mxu0 0.0
        %1568 = vmatpush1.msra.mxu0 %v1514
        %1569 = vmatprep.subr.mxu0 0.0
        %1570 = vmatpush1.msra.mxu0 0.0
        %1571 = vmatprep.subr.mxu0 0.0
        %1572 = vmatpush1.msra.mxu0 0.0
        %1573 = vmatprep.subr.mxu0 0.0
        %1574 = vmatpush1.msra.mxu0 0.0
        %1575 = vmatprep.subr.mxu0 0.0
        %1576 = vmatpush1.msra.mxu0 0.0
        %1577 = vmatprep.subr.mxu0 0.0
        %1578 = vmatpush1.msra.mxu0 0.0
        %1579 = vmatprep.subr.mxu0 0.0
        %1580 = vmatpush1.msra.mxu0 0.0
        %1581 = vmatprep.subr.mxu0 0.0
        %1582 = vmatpush1.msra.mxu0 0.0
        %1583 = vmatprep.subr.mxu0 0.0
        %1584 = vmatpush1.msra.mxu0 0.0
        %1585 = vmatprep.subr.mxu0 0.0
        %1586 = vmatpush1.msra.mxu0 0.0
        %1587 = vmatprep.subr.mxu0 0.0
        %1588 = vmatpush1.msra.mxu0 0.0
        %1589 = vmatprep.subr.mxu0 0.0
        %1590 = vmatpush1.msra.mxu0 0.0
        %1591 = vmatprep.subr.mxu0 0.0
        %1592 = vmatpush1.msra.mxu0 0.0
        %1593 = vmatprep.subr.mxu0 0.0
        %1594 = vmatpush1.msra.mxu0 0.0
        %1595 = vmatprep.subr.mxu0 0.0
        %1596 = vmatpush1.msra.mxu0 0.0
        %1597 = vmatprep.subr.mxu0 0.0
        %1598 = vmatpush1.msra.mxu0 0.0
        %1599 = vmatprep.subr.mxu0 0.0
        %1600 = vmatpush1.msra.mxu0 0.0
        %1601 = vmatprep.subr.mxu0 0.0
        %1602 = vmatpush1.msra.mxu0 0.0
        %1603 = vmatprep.subr.mxu0 0.0
        %1604 = vmatpush1.msra.mxu0 0.0
        %1605 = vmatprep.subr.mxu0 0.0
        %1606 = vmatpush1.msra.mxu0 0.0
        %1607 = vmatprep.subr.mxu0 0.0
        %1608 = vmatpush1.msra.mxu0 0.0
        %1609 = vmatprep.subr.mxu0 0.0
        %1610 = vmatpush1.msra.mxu0 0.0
        %1611 = vmatprep.subr.mxu0 0.0
        %1612 = vmatpush1.msra.mxu0 0.0
        %1613 = vmatprep.subr.mxu0 0.0
        %1614 = vmatpush1.msra.mxu0 0.0
        %1615 = vmatprep.subr.mxu0 0.0
        %1616 = vmatpush1.msra.mxu0 0.0
        %1617 = vmatprep.mubr.f32.mxu0 0.0
        %1618 = vmatmul.mubr.f32.gmra.mrb[0].mxu0 %v1551
        %v1619 = vpop.f32.mrb[0].mxu0
        %v1620 = vadd.f32 %v1520, %v1619
        %v1621 = vpop.f32.mrb[0].mxu0
        %1622 = vdwg.mxu0
        %vm1623 = vcmask 261120
        %v1624 = vsel %vm1623, %v1620, 0.0
        %1625 = vadd.xlane.f32.xlu0 %v1624
        %v1626 = vpop.xlane.xlu0 %1625
        %v1627 = vrcp.pop 32.0
        %v1628 = vmul.f32 %v1626, %v1627
        %v1629 = vsub.f32 %v1620, %v1628
        %v1630 = vmul.f32 %v1629, %v1629
        %v1631 = vsel %vm1623, %v1630, 0.0
        %1632 = vadd.xlane.f32.xlu0 %v1631
        %v1633 = vpop.xlane.xlu0 %1632
        %v1634 = vmul.f32 %v1633, %v1627
        %v1635 = vadd.f32 %v1634, 1e-05
        %v1636 = vrsqrt.pop %v1635
        %v1637 = vmul.f32 %v1629, %v1636
        %v1638 = vld [vmem:[%s5] sm:$0x1]
        %v1640 = vlaneseq
        %v1641 = vshrl.u32 %v1640, 7
        %v1642 = vsub.s32 0, %v1641
        %v1643 = vrot.slane %v1638, %v1642
        %v1645 = vmul.f32 %v1637, %v1643
        %v1646 = vld [vmem:[%s6] sm:$0x1]
        %v1648 = vlaneseq
        %v1649 = vshrl.u32 %v1648, 7
        %v1650 = vsub.s32 0, %v1649
        %v1651 = vrot.slane %v1646, %v1650
        %v1653 = vadd.f32 %v1645, %v1651
        %1654 = vst.msk [vmem:[%s269] sm:$0xff] %vm1623, %v1653
        %s1655 = sand.u32 %s181, 1
        %s1656 = scalar_lea.sflag [#allocation3], %s1655
        %s1657 = sand.u32 %s181, 1
        %s1658 = smul.addr %s1657, 8
        %s1659 = scalar_lea.vmem [#allocation2], %s1658
        // Predicated region
        $region49: #{tpu_custom_call.1} parent=47 // pred_check
          %p1660 = pneg %p191
        $region50: #{tpu_custom_call.1} parent=47 // pred_check_branch
          %1662 = sbr.rel (%p1660) target = $region52
        $region51: #{tpu_custom_call.1} parent=47 // pred_region
          %s1664 = ssub.s32 128, 128
          %1665 = vsyncadd %s1656, %s1664
          %s1666 = smul.addr %s21, 128
          %s1667 = scalar_lea.hbm %s7, %s1666
          %s1669 = sshll.u32 %s1659, 4
          %s1670 = int_to_ptr.vmem [resolvable:$true] %s1669
          %1672 = dma.vmem_to_hbm [thread:$0]  %s1670, 128, %s1667, %s1656
        $region52: #{tpu_custom_call.1} parent=47 // pred_fallthru
          _
      $region48: #{tpu_custom_call.1} parent=5 // pred_fallthru
        _
      %p1673 = scmp.le.s32.totalorder 2, %s16
      // Predicated region
      $region53: #{tpu_custom_call.1} parent=5 // pred_check
        %p1674 = pneg %p1673
      $region54: #{tpu_custom_call.1} parent=5 // pred_check_branch
        %1676 = sbr.rel (%p1674) target = $region56
      $region55: #{tpu_custom_call.1} parent=5 // pred_region
        %s1677 = ssub.s32 %s16, 2
        // Predicated region
        $region57: #{tpu_custom_call.1} parent=55 // pred_check
          %p1678 = pneg %p197
        $region58: #{tpu_custom_call.1} parent=55 // pred_check_branch
          %1680 = sbr.rel (%p1678) target = $region60
        $region59: #{tpu_custom_call.1} parent=55 // pred_region
          %s1681 = sand.u32 %s182, 1
          %s1682 = scalar_lea.sflag [#allocation3], %s1681
          %s1683 = sand.u32 %s182, 1
          %s1684 = smul.addr %s1683, 8
          %s1685 = scalar_lea.vmem [#allocation2], %s1684
          %1686 = dma.done %s1682, 128
        $region60: #{tpu_custom_call.1} parent=55 // pred_fallthru
          _
      $region56: #{tpu_custom_call.1} parent=5 // pred_fallthru
        _
    $region6: #{tpu_custom_call.1} parent=1 // loop_footer
      %s20 = sadd.s32 1, %s16
    $region7: #{tpu_custom_call.1} parent=1 // loop_footer_branch
      %15 = sbr.rel target = $region3
    $region8: #{tpu_custom_call.1} parent=1 // loop_exit
      _
    %1687 = vsyncpa [#allocation3], 1
    %s1688 = scalar_lea.sflag [#allocation3], 1
    %1689 = vsyncpa %s1688, 1

</llo_original>
